<compile_context>
chip_gen: v7x
topology: tpu7x:2x2x1
jax: 0.10.0
libtpu: 0.0.40
codegen_flags: <defaults>
</compile_context>

<pallas_src>
import jax
import jax.numpy as jnp
from jax.experimental import pallas as pl
from jax.experimental.pallas import tpu as pltpu


LN_EPS = 1e-5
OUT_PAD = 128          # lane-dense output width (final weight/bias zero-padded to this)


# ----------------------------------------------------------------------------
# Shared math. `x` and every entry of `params` only need to support `a[...]`
# indexing, so the SAME code runs on Pallas Refs inside the kernel (loads
# emitted lazily at point of use) and on plain jnp arrays.
# ----------------------------------------------------------------------------
def _dot(a, b):
    # One bf16 MXU pass, f32 accumulation.
    return jnp.dot(a.astype(jnp.bfloat16), b.astype(jnp.bfloat16),
                   preferred_element_type=jnp.float32)


def _forward_fused(x, params, pre_hidden_layers, actor_hidden_layers, hp):
    it = iter(params)
    nxt = lambda: next(it)[...]                       # lazy load at point of use

    xv = x[...].astype(jnp.float32)                   # (TB, O+Z) = [obs | z]

    # ---- fused preprocessors: [obs-preproc | obs_z-preproc] along lanes, width 2*hp
    w1, b1 = nxt(), nxt()
    h = _dot(xv, w1) + b1                             # (TB, 2*hp), one MXU push

    g, beta = nxt(), nxt()
    # Segmented LayerNorm: each hp-lane half is normalized independently.
    col = jax.lax.broadcasted_iota(jnp.int32, h.shape, 1)
    left = col < hp
    inv_hp = 1.0 / hp

    def seg_mean(v):
        # one masked + one full reduction; right-half sum = total - left-half sum
        s_l = jnp.sum(jnp.where(left, v, 0.0), axis=-1, keepdims=True)
        s_all = jnp.sum(v, axis=-1, keepdims=True)
        return jnp.where(left, s_l, s_all - s_l) * inv_hp

    m = seg_mean(h)                                   # E[x]   (independent reductions:
    ex2 = seg_mean(h * h)                             # E[x^2]  no dependent chain)
    v = ex2 - m * m
    h = jnp.tanh((h - m) * jax.lax.rsqrt(v + LN_EPS) * g + beta)

    for _ in range(pre_hidden_layers - 1):            # block-diagonal fused hiddens
        w, bb = nxt(), nxt()
        h = jnp.maximum(_dot(h, w) + bb, 0.0)
    w, bb = nxt(), nxt()
    e = jnp.maximum(_dot(h, w) + bb, 0.0)             # (TB, 2F) = [e_obs | e_oz]

    # ---- actor trunk (concat(e_obs, e_oz) is already the fused `e`)
    w, bb = nxt(), nxt()
    h = jnp.maximum(_dot(e, w) + bb, 0.0)
    for _ in range(actor_hidden_layers - 1):
        w, bb = nxt(), nxt()
        h = jnp.maximum(_dot(h, w) + bb, 0.0)
    w, bb = nxt(), nxt()
    return jnp.tanh(_dot(h, w) + bb)                  # (TB, OUT_PAD); cols [:A] valid


# ----------------------------------------------------------------------------
# Pallas kernel + wrapper
# ----------------------------------------------------------------------------
def _make_kernel(n_params, pre_hidden_layers, actor_hidden_layers, hp):
    def kernel(*refs):
        x_ref = refs[0]
        param_refs = refs[1:1 + n_params]
        mu_ref = refs[1 + n_params]
        mu_ref[...] = _forward_fused(x_ref, param_refs,
                                     pre_hidden_layers, actor_hidden_layers, hp)
    return kernel


def _pick_tile(B, tile_b):
    """Batch tile: multiple of 16, >=16, and >=2 grid steps whenever B allows."""
    TB = max(16, (min(tile_b, B) // 16) * 16)
    if B >= 32:
        half = max(16, ((-(-B // 2)) // 16) * 16)     # ~half the batch, multiple of 16
        TB = min(TB, half)                            # guarantees >= 2 grid steps
    return TB


def actor_forward(observation, z, std, fused_params, *,
                  pre_hidden_layers, actor_hidden_layers, action_length,
                  preprocessor_hidden_dimension, tile_b=256):
    """Returns (action, (mu, std)) where (mu, std) parameterize TruncatedNormal(mu, std)."""
    B, O = observation.shape
    Z = z.shape[1]
    A = action_length

    # single lane-dense input stream: [obs | z]
    x = jnp.concatenate([observation, z], axis=1)     # (B, O+Z)

    TB = _pick_tile(B, tile_b)
    B_pad = -(-B // TB) * TB                          # pad batch instead of TB=B fallback
    if B_pad != B:
        x = jnp.pad(x, ((0, B_pad - B), (0, 0)))

    n_params = len(fused_params)
    kernel = _make_kernel(n_params, pre_hidden_layers, actor_hidden_layers,
                          preprocessor_hidden_dimension)

    in_specs = [pl.BlockSpec((TB, O + Z), lambda i: (i, 0))]
    # Weights/biases: full-array blocks, grid-invariant (same block every step).
    in_specs += [pl.BlockSpec(tuple(p.shape), lambda i: (0, 0)) for p in fused_params]

    out_specs = pl.BlockSpec((TB, OUT_PAD), lambda i: (i, 0))
    out_shape = jax.ShapeDtypeStruct((B_pad, OUT_PAD), jnp.float32)

    mu_full = pl.pallas_call(
        kernel,
        out_shape=out_shape,
        grid=(B_pad // TB,),
        in_specs=in_specs,
        out_specs=out_specs,
        compiler_params=pltpu.CompilerParams(
            dimension_semantics=("parallel",),
            vmem_limit_bytes=48 * 1024 * 1024),
    )(x, *fused_params)

    mu = mu_full[:B, :A]
    action = mu                    # sample=False => TruncatedNormal(mu, std).mean == mu
    return action, (mu, jnp.float32(std))


# ----------------------------------------------------------------------------
# Deterministic parameter construction (PyTorch-default-style uniform init)
# and packing into the fused / lane-dense layout used by the kernel.
# ----------------------------------------------------------------------------
def init_params(key, O, Z, Hp, F, Ha, A, Lp, La):
    keys = iter(jax.random.split(key, 64))

    def lin(fan_in, shape):
        bound = 1.0 / jnp.sqrt(jnp.float32(fan_in))
        return jax.random.uniform(next(keys), shape, jnp.float32, -bound, bound)

    def pre_block(in_dims):
        fan = sum(in_dims)
        return dict(
            w1=[lin(fan, (d, Hp)) for d in in_dims],
            b1=lin(fan, (1, Hp)),
            g=jnp.ones((1, Hp), jnp.float32),
            beta=jnp.zeros((1, Hp), jnp.float32),
            hidden=[(lin(Hp, (Hp, Hp)), lin(Hp, (1, Hp))) for _ in range(Lp - 1)],
            out=(lin(Hp, (Hp, F)), lin(Hp, (1, F))),
        )

    return dict(
        pre_obs=pre_block([O]),
        pre_oz=pre_block([O, Z]),
        trunk_w1=[lin(2 * F, (F, Ha)), lin(2 * F, (F, Ha))],
        trunk_b1=lin(2 * F, (1, Ha)),
        trunk_hidden=[(lin(Ha, (Ha, Ha)), lin(Ha, (1, Ha))) for _ in range(La - 1)],
        trunk_out=(lin(Ha, (Ha, A)), lin(Ha, (1, A))),
    )


def pack_params(p, O, Z, Hp, F, Ha, A):
    """Fuse the two preprocessors into one 2*Hp-wide stack fed by a single
    (O+Z, 2*Hp) first layer; pad the final layer to OUT_PAD lanes.
    Matmul weights -> bf16, biases/LN params stay f32."""
    bf = lambda x: x.astype(jnp.bfloat16)
    f32 = lambda x: x.astype(jnp.float32)
    po, pz = p["pre_obs"], p["pre_oz"]
    fused = []

    # first layer on concat([obs, z]): obs rows feed both halves; z rows feed only
    # the right (obs_z) half (zero block on the left).
    w1_obs = jnp.concatenate([po["w1"][0], pz["w1"][0]], axis=1)                     # (O, 2Hp)
    w1_z = jnp.concatenate([jnp.zeros((Z, Hp), jnp.float32), pz["w1"][1]], axis=1)   # (Z, 2Hp)
    w1 = jnp.concatenate([w1_obs, w1_z], axis=0)                                     # (O+Z, 2Hp)
    fused += [bf(w1),
              f32(jnp.concatenate([po["b1"], pz["b1"]], axis=1)),
              f32(jnp.concatenate([po["g"], pz["g"]], axis=1)),
              f32(jnp.concatenate([po["beta"], pz["beta"]], axis=1))]

    # hidden layers: block-diagonal (2Hp, 2Hp)
    for (wo, bo), (wz, bz) in zip(po["hidden"], pz["hidden"]):
        w = jnp.block([[wo, jnp.zeros((Hp, Hp))], [jnp.zeros((Hp, Hp)), wz]])
        fused += [bf(w), f32(jnp.concatenate([bo, bz], axis=1))]

    # output layer: block-diagonal (2Hp, 2F)
    (wo, bo), (wz, bz) = po["out"], pz["out"]
    w = jnp.block([[wo, jnp.zeros((Hp, F))], [jnp.zeros((Hp, F)), wz]])
    fused += [bf(w), f32(jnp.concatenate([bo, bz], axis=1))]

    # trunk first layer: concat([e_obs, e_oz]) realized by stacking input rows
    w1t = jnp.concatenate([p["trunk_w1"][0], p["trunk_w1"][1]], axis=0)              # (2F, Ha)
    fused += [bf(w1t), f32(p["trunk_b1"])]
    for w, bb in p["trunk_hidden"]:
        fused += [bf(w), f32(bb)]

    # trunk output: zero-pad to OUT_PAD lanes for unmasked, lane-dense stores
    w, bb = p["trunk_out"]
    w_pad = jnp.zeros((Ha, OUT_PAD), jnp.float32).at[:, :A].set(w)
    b_pad = jnp.zeros((1, OUT_PAD), jnp.float32).at[:, :A].set(bb)
    fused += [bf(w_pad), f32(b_pad)]
    return fused


# ----------------------------------------------------------------------------
# Independent (unfused) pure-JAX reference
# ----------------------------------------------------------------------------
def _forward_unfused(obs, z, p, Lp, La):
    def layernorm(x, g, beta):
        m = jnp.mean(x, axis=-1, keepdims=True)
        v = jnp.mean(jnp.square(x - m), axis=-1, keepdims=True)
        return (x - m) * jax.lax.rsqrt(v + LN_EPS) * g + beta

    def preproc(x_parts, blk):
        h = blk["b1"]
        for xp, w in zip(x_parts, blk["w1"]):
            h = h + _dot(xp, w)
        h = jnp.tanh(layernorm(h, blk["g"], blk["beta"]))
        for w, bb in blk["hidden"]:
            h = jnp.maximum(_dot(h, w) + bb, 0.0)
        w, bb = blk["out"]
        return jnp.maximum(_dot(h, w) + bb, 0.0)

    e_obs = preproc([obs], p["pre_obs"])
    e_oz = preproc([obs, z], p["pre_oz"])
    h = jnp.maximum(_dot(e_obs, p["trunk_w1"][0]) + _dot(e_oz, p["trunk_w1"][1])
                    + p["trunk_b1"], 0.0)
    for w, bb in p["trunk_hidden"]:
        h = jnp.maximum(_dot(h, w) + bb, 0.0)
    w, bb = p["trunk_out"]
    return jnp.tanh(_dot(h, w) + bb)


if __name__ == "__main__":
    # Small, module-consistent shapes. B=72 exercises batch padding (TB=32 -> 3
    # parallel grid steps, padded to 96) with the default tile selection.
    B = 72           # batch
    O = 24           # observation_length
    Z = 16           # z_dimension
    Hp = 64          # preprocessor_hidden_dimension  (fused stack width = 2*Hp = 128)
    F = 32           # preprocessor_feature_space_dimension
    Ha = 64          # actor_hidden_dimension
    A = 6            # action_length
    Lp = 2           # preprocessor_hidden_layers
    La = 2           # actor_hidden_layers
    std = 0.2        # std from the std_dev_schedule

    key = jax.random.PRNGKey(0)
    k_obs, k_z, k_par = jax.random.split(key, 3)
    observation = jax.random.normal(k_obs, (B, O), jnp.float32)
    z = jax.random.normal(k_z, (B, Z), jnp.float32)
    z = z / (jnp.linalg.norm(z, axis=-1, keepdims=True) + 1e-8) * jnp.sqrt(jnp.float32(Z))

    p = init_params(k_par, O, Z, Hp, F, Ha, A, Lp, La)
    fused_params = pack_params(p, O, Z, Hp, F, Ha, A)

    action, (mu, std_out) = actor_forward(
        observation, z, std, fused_params,
        pre_hidden_layers=Lp, actor_hidden_layers=La, action_length=A,
        preprocessor_hidden_dimension=Hp)
    action = jax.block_until_ready(action)
    mu = jax.block_until_ready(mu)

    # Pure-JAX unfused reference (same bf16 matmul inputs, f32 accumulation).
    mu_ref = _forward_unfused(observation, z, p, Lp, La)
    assert action.shape == (B, A) and mu.shape == (B, A)
    assert jnp.all(jnp.abs(action) <= 1.0 + 1e-6)
    assert jnp.allclose(mu, mu_ref, atol=1e-2, rtol=1e-2), "kernel/reference mismatch"
    assert jnp.allclose(action, mu), "action must equal the mean for sample=False"

    print("KERNEL_OK")
</pallas_src>

<mosaic_0001>
module attributes {stable_mosaic.version = 11 : i64} {
  func.func @kernel(%arg0: i32, %arg1: memref<32x40xf32, #tpu.memory_space<vmem>>, %arg2: memref<40x128xbf16, #tpu.memory_space<vmem>>, %arg3: memref<1x128xf32, #tpu.memory_space<vmem>>, %arg4: memref<1x128xf32, #tpu.memory_space<vmem>>, %arg5: memref<1x128xf32, #tpu.memory_space<vmem>>, %arg6: memref<128x128xbf16, #tpu.memory_space<vmem>>, %arg7: memref<1x128xf32, #tpu.memory_space<vmem>>, %arg8: memref<128x64xbf16, #tpu.memory_space<vmem>>, %arg9: memref<1x64xf32, #tpu.memory_space<vmem>>, %arg10: memref<64x64xbf16, #tpu.memory_space<vmem>>, %arg11: memref<1x64xf32, #tpu.memory_space<vmem>>, %arg12: memref<64x64xbf16, #tpu.memory_space<vmem>>, %arg13: memref<1x64xf32, #tpu.memory_space<vmem>>, %arg14: memref<64x128xbf16, #tpu.memory_space<vmem>>, %arg15: memref<1x128xf32, #tpu.memory_space<vmem>>, %arg16: memref<32x128xf32, #tpu.memory_space<vmem>>) attributes {dimension_semantics = [#tpu.dimension_semantics<parallel>], iteration_bounds = array<i64: 3>, scalar_prefetch = 0 : i64, scratch_operands = 0 : i64, tpu.core_type = #tpu.core_type<tc>, window_params = [{transform_indices = @transform_0, window_bounds = array<i64: 32, 40>}, {pipeline_mode = #tpu.pipeline_mode<synchronous>, transform_indices = @transform_1, window_bounds = array<i64: 40, 128>}, {pipeline_mode = #tpu.pipeline_mode<synchronous>, transform_indices = @transform_2, window_bounds = array<i64: 1, 128>}, {pipeline_mode = #tpu.pipeline_mode<synchronous>, transform_indices = @transform_3, window_bounds = array<i64: 1, 128>}, {pipeline_mode = #tpu.pipeline_mode<synchronous>, transform_indices = @transform_4, window_bounds = array<i64: 1, 128>}, {pipeline_mode = #tpu.pipeline_mode<synchronous>, transform_indices = @transform_5, window_bounds = array<i64: 128, 128>}, {pipeline_mode = #tpu.pipeline_mode<synchronous>, transform_indices = @transform_6, window_bounds = array<i64: 1, 128>}, {pipeline_mode = #tpu.pipeline_mode<synchronous>, transform_indices = @transform_7, window_bounds = array<i64: 128, 64>}, {pipeline_mode = #tpu.pipeline_mode<synchronous>, transform_indices = @transform_8, window_bounds = array<i64: 1, 64>}, {pipeline_mode = #tpu.pipeline_mode<synchronous>, transform_indices = @transform_9, window_bounds = array<i64: 64, 64>}, {pipeline_mode = #tpu.pipeline_mode<synchronous>, transform_indices = @transform_10, window_bounds = array<i64: 1, 64>}, {pipeline_mode = #tpu.pipeline_mode<synchronous>, transform_indices = @transform_11, window_bounds = array<i64: 64, 64>}, {pipeline_mode = #tpu.pipeline_mode<synchronous>, transform_indices = @transform_12, window_bounds = array<i64: 1, 64>}, {pipeline_mode = #tpu.pipeline_mode<synchronous>, transform_indices = @transform_13, window_bounds = array<i64: 64, 128>}, {pipeline_mode = #tpu.pipeline_mode<synchronous>, transform_indices = @transform_14, window_bounds = array<i64: 1, 128>}, {transform_indices = @transform_15, window_bounds = array<i64: 32, 128>}]} {
    %c0 = arith.constant 0 : index
    %c0_0 = arith.constant 0 : index
    %0 = vector.load %arg1[%c0, %c0_0] : memref<32x40xf32, #tpu.memory_space<vmem>>, vector<32x40xf32>
    %c0_1 = arith.constant 0 : index
    %c0_2 = arith.constant 0 : index
    %1 = vector.load %arg2[%c0_1, %c0_2] : memref<40x128xbf16, #tpu.memory_space<vmem>>, vector<40x128xbf16>
    %c0_3 = arith.constant 0 : index
    %c0_4 = arith.constant 0 : index
    %2 = vector.load %arg3[%c0_3, %c0_4] : memref<1x128xf32, #tpu.memory_space<vmem>>, vector<1x128xf32>
    %3 = arith.truncf %0 : vector<32x40xf32> to vector<32x40xbf16>
    %cst = arith.constant dense<0.000000e+00> : vector<32x128xf32>
    %4 = tpu.matmul %3, %1, %cst {dimension_numbers = #tpu.dot_dimension_numbers<[1], [0], [0], [1], [0, 0, 1, 1], [], []>} : vector<32x40xbf16>, vector<40x128xbf16>, vector<32x128xf32> -> vector<32x128xf32>
    %5 = vector.broadcast %2 : vector<1x128xf32> to vector<32x128xf32>
    %6 = arith.addf %4, %5 : vector<32x128xf32>
    %c0_5 = arith.constant 0 : index
    %c0_6 = arith.constant 0 : index
    %7 = vector.load %arg4[%c0_5, %c0_6] : memref<1x128xf32, #tpu.memory_space<vmem>>, vector<1x128xf32>
    %c0_7 = arith.constant 0 : index
    %c0_8 = arith.constant 0 : index
    %8 = vector.load %arg5[%c0_7, %c0_8] : memref<1x128xf32, #tpu.memory_space<vmem>>, vector<1x128xf32>
    %9 = tpu.iota {dimensions = array<i32: 1>} : vector<32x128xi32>
    %c64_i32 = arith.constant 64 : i32
    %10 = vector.broadcast %c64_i32 : i32 to vector<32x128xi32>
    %11 = arith.cmpi slt, %9, %10 : vector<32x128xi32>
    %cst_9 = arith.constant 0.000000e+00 : f32
    %12 = vector.broadcast %cst_9 : f32 to vector<32x128xf32>
    %13 = arith.select %11, %6, %12 : vector<32x128xi1>, vector<32x128xf32>
    %cst_10 = arith.constant dense<0.000000e+00> : vector<32xf32>
    %14 = vector.multi_reduction <add>, %13, %cst_10 [1] : vector<32x128xf32> to vector<32xf32>
    %15 = vector.shape_cast %14 : vector<32xf32> to vector<32x1xf32>
    %cst_11 = arith.constant dense<0.000000e+00> : vector<32xf32>
    %16 = vector.multi_reduction <add>, %6, %cst_11 [1] : vector<32x128xf32> to vector<32xf32>
    %17 = vector.shape_cast %16 : vector<32xf32> to vector<32x1xf32>
    %18 = arith.subf %17, %15 : vector<32x1xf32>
    %19 = vector.shape_cast %15 : vector<32x1xf32> to vector<32x1xf32>
    %20 = vector.broadcast %19 : vector<32x1xf32> to vector<32x128xf32>
    %21 = vector.shape_cast %18 : vector<32x1xf32> to vector<32x1xf32>
    %22 = vector.broadcast %21 : vector<32x1xf32> to vector<32x128xf32>
    %23 = arith.select %11, %20, %22 : vector<32x128xi1>, vector<32x128xf32>
    %cst_12 = arith.constant 1.562500e-02 : f32
    %24 = vector.broadcast %cst_12 : f32 to vector<32x128xf32>
    %25 = arith.mulf %23, %24 : vector<32x128xf32>
    %26 = arith.mulf %6, %6 : vector<32x128xf32>
    %cst_13 = arith.constant 0.000000e+00 : f32
    %27 = vector.broadcast %cst_13 : f32 to vector<32x128xf32>
    %28 = arith.select %11, %26, %27 : vector<32x128xi1>, vector<32x128xf32>
    %cst_14 = arith.constant dense<0.000000e+00> : vector<32xf32>
    %29 = vector.multi_reduction <add>, %28, %cst_14 [1] : vector<32x128xf32> to vector<32xf32>
    %30 = vector.shape_cast %29 : vector<32xf32> to vector<32x1xf32>
    %cst_15 = arith.constant dense<0.000000e+00> : vector<32xf32>
    %31 = vector.multi_reduction <add>, %26, %cst_15 [1] : vector<32x128xf32> to vector<32xf32>
    %32 = vector.shape_cast %31 : vector<32xf32> to vector<32x1xf32>
    %33 = arith.subf %32, %30 : vector<32x1xf32>
    %34 = vector.shape_cast %30 : vector<32x1xf32> to vector<32x1xf32>
    %35 = vector.broadcast %34 : vector<32x1xf32> to vector<32x128xf32>
    %36 = vector.shape_cast %33 : vector<32x1xf32> to vector<32x1xf32>
    %37 = vector.broadcast %36 : vector<32x1xf32> to vector<32x128xf32>
    %38 = arith.select %11, %35, %37 : vector<32x128xi1>, vector<32x128xf32>
    %cst_16 = arith.constant 1.562500e-02 : f32
    %39 = vector.broadcast %cst_16 : f32 to vector<32x128xf32>
    %40 = arith.mulf %38, %39 : vector<32x128xf32>
    %41 = arith.mulf %25, %25 : vector<32x128xf32>
    %42 = arith.subf %40, %41 : vector<32x128xf32>
    %43 = arith.subf %6, %25 : vector<32x128xf32>
    %cst_17 = arith.constant 9.99999974E-6 : f32
    %44 = vector.broadcast %cst_17 : f32 to vector<32x128xf32>
    %45 = arith.addf %42, %44 : vector<32x128xf32>
    %46 = math.rsqrt %45 : vector<32x128xf32>
    %47 = arith.mulf %43, %46 : vector<32x128xf32>
    %48 = vector.broadcast %7 : vector<1x128xf32> to vector<32x128xf32>
    %49 = arith.mulf %47, %48 : vector<32x128xf32>
    %50 = vector.broadcast %8 : vector<1x128xf32> to vector<32x128xf32>
    %51 = arith.addf %49, %50 : vector<32x128xf32>
    %52 = math.tanh %51 : vector<32x128xf32>
    %c0_18 = arith.constant 0 : index
    %c0_19 = arith.constant 0 : index
    %53 = vector.load %arg6[%c0_18, %c0_19] : memref<128x128xbf16, #tpu.memory_space<vmem>>, vector<128x128xbf16>
    %c0_20 = arith.constant 0 : index
    %c0_21 = arith.constant 0 : index
    %54 = vector.load %arg7[%c0_20, %c0_21] : memref<1x128xf32, #tpu.memory_space<vmem>>, vector<1x128xf32>
    %55 = arith.truncf %52 : vector<32x128xf32> to vector<32x128xbf16>
    %cst_22 = arith.constant dense<0.000000e+00> : vector<32x128xf32>
    %56 = tpu.matmul %55, %53, %cst_22 {dimension_numbers = #tpu.dot_dimension_numbers<[1], [0], [0], [1], [0, 0, 1, 1], [], []>} : vector<32x128xbf16>, vector<128x128xbf16>, vector<32x128xf32> -> vector<32x128xf32>
    %57 = vector.broadcast %54 : vector<1x128xf32> to vector<32x128xf32>
    %58 = arith.addf %56, %57 : vector<32x128xf32>
    %cst_23 = arith.constant 0.000000e+00 : f32
    %59 = vector.broadcast %cst_23 : f32 to vector<32x128xf32>
    %60 = arith.maximumf %58, %59 : vector<32x128xf32>
    %c0_24 = arith.constant 0 : index
    %c0_25 = arith.constant 0 : index
    %61 = vector.load %arg8[%c0_24, %c0_25] : memref<128x64xbf16, #tpu.memory_space<vmem>>, vector<128x64xbf16>
    %c0_26 = arith.constant 0 : index
    %c0_27 = arith.constant 0 : index
    %62 = vector.load %arg9[%c0_26, %c0_27] : memref<1x64xf32, #tpu.memory_space<vmem>>, vector<1x64xf32>
    %63 = arith.truncf %60 : vector<32x128xf32> to vector<32x128xbf16>
    %cst_28 = arith.constant dense<0.000000e+00> : vector<32x64xf32>
    %64 = tpu.matmul %63, %61, %cst_28 {dimension_numbers = #tpu.dot_dimension_numbers<[1], [0], [0], [1], [0, 0, 1, 1], [], []>} : vector<32x128xbf16>, vector<128x64xbf16>, vector<32x64xf32> -> vector<32x64xf32>
    %65 = vector.broadcast %62 : vector<1x64xf32> to vector<32x64xf32>
    %66 = arith.addf %64, %65 : vector<32x64xf32>
    %cst_29 = arith.constant 0.000000e+00 : f32
    %67 = vector.broadcast %cst_29 : f32 to vector<32x64xf32>
    %68 = arith.maximumf %66, %67 : vector<32x64xf32>
    %c0_30 = arith.constant 0 : index
    %c0_31 = arith.constant 0 : index
    %69 = vector.load %arg10[%c0_30, %c0_31] : memref<64x64xbf16, #tpu.memory_space<vmem>>, vector<64x64xbf16>
    %c0_32 = arith.constant 0 : index
    %c0_33 = arith.constant 0 : index
    %70 = vector.load %arg11[%c0_32, %c0_33] : memref<1x64xf32, #tpu.memory_space<vmem>>, vector<1x64xf32>
    %71 = arith.truncf %68 : vector<32x64xf32> to vector<32x64xbf16>
    %cst_34 = arith.constant dense<0.000000e+00> : vector<32x64xf32>
    %72 = tpu.matmul %71, %69, %cst_34 {dimension_numbers = #tpu.dot_dimension_numbers<[1], [0], [0], [1], [0, 0, 1, 1], [], []>} : vector<32x64xbf16>, vector<64x64xbf16>, vector<32x64xf32> -> vector<32x64xf32>
    %73 = vector.broadcast %70 : vector<1x64xf32> to vector<32x64xf32>
    %74 = arith.addf %72, %73 : vector<32x64xf32>
    %cst_35 = arith.constant 0.000000e+00 : f32
    %75 = vector.broadcast %cst_35 : f32 to vector<32x64xf32>
    %76 = arith.maximumf %74, %75 : vector<32x64xf32>
    %c0_36 = arith.constant 0 : index
    %c0_37 = arith.constant 0 : index
    %77 = vector.load %arg12[%c0_36, %c0_37] : memref<64x64xbf16, #tpu.memory_space<vmem>>, vector<64x64xbf16>
    %c0_38 = arith.constant 0 : index
    %c0_39 = arith.constant 0 : index
    %78 = vector.load %arg13[%c0_38, %c0_39] : memref<1x64xf32, #tpu.memory_space<vmem>>, vector<1x64xf32>
    %79 = arith.truncf %76 : vector<32x64xf32> to vector<32x64xbf16>
    %cst_40 = arith.constant dense<0.000000e+00> : vector<32x64xf32>
    %80 = tpu.matmul %79, %77, %cst_40 {dimension_numbers = #tpu.dot_dimension_numbers<[1], [0], [0], [1], [0, 0, 1, 1], [], []>} : vector<32x64xbf16>, vector<64x64xbf16>, vector<32x64xf32> -> vector<32x64xf32>
    %81 = vector.broadcast %78 : vector<1x64xf32> to vector<32x64xf32>
    %82 = arith.addf %80, %81 : vector<32x64xf32>
    %cst_41 = arith.constant 0.000000e+00 : f32
    %83 = vector.broadcast %cst_41 : f32 to vector<32x64xf32>
    %84 = arith.maximumf %82, %83 : vector<32x64xf32>
    %c0_42 = arith.constant 0 : index
    %c0_43 = arith.constant 0 : index
    %85 = vector.load %arg14[%c0_42, %c0_43] : memref<64x128xbf16, #tpu.memory_space<vmem>>, vector<64x128xbf16>
    %c0_44 = arith.constant 0 : index
    %c0_45 = arith.constant 0 : index
    %86 = vector.load %arg15[%c0_44, %c0_45] : memref<1x128xf32, #tpu.memory_space<vmem>>, vector<1x128xf32>
    %87 = arith.truncf %84 : vector<32x64xf32> to vector<32x64xbf16>
    %cst_46 = arith.constant dense<0.000000e+00> : vector<32x128xf32>
    %88 = tpu.matmul %87, %85, %cst_46 {dimension_numbers = #tpu.dot_dimension_numbers<[1], [0], [0], [1], [0, 0, 1, 1], [], []>} : vector<32x64xbf16>, vector<64x128xbf16>, vector<32x128xf32> -> vector<32x128xf32>
    %89 = vector.broadcast %86 : vector<1x128xf32> to vector<32x128xf32>
    %90 = arith.addf %88, %89 : vector<32x128xf32>
    %91 = math.tanh %90 : vector<32x128xf32>
    %c0_47 = arith.constant 0 : index
    %c0_48 = arith.constant 0 : index
    %92 = vector.load %arg16[%c0_47, %c0_48] : memref<32x128xf32, #tpu.memory_space<vmem>>, vector<32x128xf32>
    tpu.vector_store %arg16[%c0_47, %c0_48], %91 {strides = array<i32>} : memref<32x128xf32, #tpu.memory_space<vmem>>, vector<32x128xf32>,
    return
  }
  func.func @transform_0(%arg0: i32) -> (i32, i32) {
    %c0_i32 = arith.constant 0 : i32
    %c0_i32_0 = arith.constant 0 : i32
    return %arg0, %c0_i32 : i32, i32
  }
  func.func @transform_1(%arg0: i32) -> (i32, i32) {
    %c0_i32 = arith.constant 0 : i32
    %c0_i32_0 = arith.constant 0 : i32
    %c0_i32_1 = arith.constant 0 : i32
    return %c0_i32, %c0_i32_0 : i32, i32
  }
  func.func @transform_2(%arg0: i32) -> (i32, i32) {
    %c0_i32 = arith.constant 0 : i32
    %c0_i32_0 = arith.constant 0 : i32
    %c0_i32_1 = arith.constant 0 : i32
    return %c0_i32, %c0_i32_0 : i32, i32
  }
  func.func @transform_3(%arg0: i32) -> (i32, i32) {
    %c0_i32 = arith.constant 0 : i32
    %c0_i32_0 = arith.constant 0 : i32
    %c0_i32_1 = arith.constant 0 : i32
    return %c0_i32, %c0_i32_0 : i32, i32
  }
  func.func @transform_4(%arg0: i32) -> (i32, i32) {
    %c0_i32 = arith.constant 0 : i32
    %c0_i32_0 = arith.constant 0 : i32
    %c0_i32_1 = arith.constant 0 : i32
    return %c0_i32, %c0_i32_0 : i32, i32
  }
  func.func @transform_5(%arg0: i32) -> (i32, i32) {
    %c0_i32 = arith.constant 0 : i32
    %c0_i32_0 = arith.constant 0 : i32
    %c0_i32_1 = arith.constant 0 : i32
    return %c0_i32, %c0_i32_0 : i32, i32
  }
  func.func @transform_6(%arg0: i32) -> (i32, i32) {
    %c0_i32 = arith.constant 0 : i32
    %c0_i32_0 = arith.constant 0 : i32
    %c0_i32_1 = arith.constant 0 : i32
    return %c0_i32, %c0_i32_0 : i32, i32
  }
  func.func @transform_7(%arg0: i32) -> (i32, i32) {
    %c0_i32 = arith.constant 0 : i32
    %c0_i32_0 = arith.constant 0 : i32
    %c0_i32_1 = arith.constant 0 : i32
    return %c0_i32, %c0_i32_0 : i32, i32
  }
  func.func @transform_8(%arg0: i32) -> (i32, i32) {
    %c0_i32 = arith.constant 0 : i32
    %c0_i32_0 = arith.constant 0 : i32
    %c0_i32_1 = arith.constant 0 : i32
    return %c0_i32, %c0_i32_0 : i32, i32
  }
  func.func @transform_9(%arg0: i32) -> (i32, i32) {
    %c0_i32 = arith.constant 0 : i32
    %c0_i32_0 = arith.constant 0 : i32
    %c0_i32_1 = arith.constant 0 : i32
    return %c0_i32, %c0_i32_0 : i32, i32
  }
  func.func @transform_10(%arg0: i32) -> (i32, i32) {
    %c0_i32 = arith.constant 0 : i32
    %c0_i32_0 = arith.constant 0 : i32
    %c0_i32_1 = arith.constant 0 : i32
    return %c0_i32, %c0_i32_0 : i32, i32
  }
  func.func @transform_11(%arg0: i32) -> (i32, i32) {
    %c0_i32 = arith.constant 0 : i32
    %c0_i32_0 = arith.constant 0 : i32
    %c0_i32_1 = arith.constant 0 : i32
    return %c0_i32, %c0_i32_0 : i32, i32
  }
  func.func @transform_12(%arg0: i32) -> (i32, i32) {
    %c0_i32 = arith.constant 0 : i32
    %c0_i32_0 = arith.constant 0 : i32
    %c0_i32_1 = arith.constant 0 : i32
    return %c0_i32, %c0_i32_0 : i32, i32
  }
  func.func @transform_13(%arg0: i32) -> (i32, i32) {
    %c0_i32 = arith.constant 0 : i32
    %c0_i32_0 = arith.constant 0 : i32
    %c0_i32_1 = arith.constant 0 : i32
    return %c0_i32, %c0_i32_0 : i32, i32
  }
  func.func @transform_14(%arg0: i32) -> (i32, i32) {
    %c0_i32 = arith.constant 0 : i32
    %c0_i32_0 = arith.constant 0 : i32
    %c0_i32_1 = arith.constant 0 : i32
    return %c0_i32, %c0_i32_0 : i32, i32
  }
  func.func @transform_15(%arg0: i32) -> (i32, i32) {
    %c0_i32 = arith.constant 0 : i32
    %c0_i32_0 = arith.constant 0 : i32
    return %arg0, %c0_i32 : i32, i32
  }
}

</mosaic_0001>

<llo_original>
// kernel: tpu_custom_call.1
$region0: #{tpu_custom_call.1}
  #allocation0 [shape = 'u32[]', space=smem, size = 0x4, offset = 0x4, fixed_abs, tag = 'smem constant byte address 0x4 - core index']
  #allocation1 [shape = 'u32[144,128]{1,0:T(1,128)}', space=vmem, size = 0x12000, scoped, tag = 'internal scratch']
  %s0 = inlined_call_operand.vmem [shape: f32[96,40], index: 0, kind: input, shape index: {}]
  %s1 = inlined_call_operand.vmem [shape: bf16[40,128], index: 1, kind: input, shape index: {}]
  %s2 = inlined_call_operand.vmem [shape: f32[1,128], index: 2, kind: input, shape index: {}]
  %s3 = inlined_call_operand.vmem [shape: f32[1,128], index: 3, kind: input, shape index: {}]
  %s4 = inlined_call_operand.vmem [shape: f32[1,128], index: 4, kind: input, shape index: {}]
  %s5 = inlined_call_operand.vmem [shape: bf16[128,128], index: 5, kind: input, shape index: {}]
  %s6 = inlined_call_operand.vmem [shape: f32[1,128], index: 6, kind: input, shape index: {}]
  %s7 = inlined_call_operand.vmem [shape: bf16[128,64], index: 7, kind: input, shape index: {}]
  %s8 = inlined_call_operand.vmem [shape: f32[1,64], index: 8, kind: input, shape index: {}]
  %s9 = inlined_call_operand.vmem [shape: bf16[64,64], index: 9, kind: input, shape index: {}]
  %s10 = inlined_call_operand.vmem [shape: f32[1,64], index: 10, kind: input, shape index: {}]
  %s11 = inlined_call_operand.vmem [shape: bf16[64,64], index: 11, kind: input, shape index: {}]
  %s12 = inlined_call_operand.vmem [shape: f32[1,64], index: 12, kind: input, shape index: {}]
  %s13 = inlined_call_operand.vmem [shape: bf16[64,128], index: 13, kind: input, shape index: {}]
  %s14 = inlined_call_operand.vmem [shape: f32[1,128], index: 14, kind: input, shape index: {}]
  %s15 = inlined_call_operand.hbm [shape: f32[96,128], index: 15, kind: output, shape index: {}]
  %s16 = sld [smem:[#allocation0]]
  $region93: #{tpu_custom_call.1} parent=0
    _
  %s18 = ssub.s32 1, %s16
  %s19 = scalar_select 0, %s18, %s16
  $region1: #{tpu_custom_call.1} parent=0
    #allocation2 [shape = 'u8[32768]{0}', space=vmem, size = 0x8000, scoped, tag = 'output window, operand 0']
    #allocation3 [shape = 's32[2]{0}', space=sflag, size = 0x8, scoped, tag = 'scoped memory for tpu_custom_call.1']
    %20 = vsyncpa [#allocation3], 0
    %s21 = scalar_lea.sflag [#allocation3], 1
    %22 = vsyncpa %s21, 0
    loop: start=0, step=1, limit=5
    $region2: #{tpu_custom_call.1} parent=1 // loop_pre_header
      _
    $region3: #{tpu_custom_call.1} parent=1 // loop_header
      %s24 = sphi 0, %s28
      %p25 = scmp.ge.s32.totalorder %s24, 5
      %s34 = sphi 0, %s36
      %s37 = sphi 0, %s34
      %s38 = sphi 0, %s37
      %s54 = sphi 0, %s38
      %s58 = sphi 0, %s58
      %s60 = sphi 0, %s58
      %s61 = sphi 0, %s60
      %s75 = sphi 0, %s61
      %s79 = sphi 0, %s79
      %s81 = sphi 0, %s79
      %s82 = sphi 0, %s81
      %s96 = sphi 0, %s82
      %s100 = sphi 0, %s100
      %s102 = sphi 0, %s100
      %s103 = sphi 0, %s102
      %s117 = sphi 0, %s103
      %s121 = sphi 0, %s121
      %s123 = sphi 0, %s121
      %s124 = sphi 0, %s123
      %s138 = sphi 0, %s124
      %s142 = sphi 0, %s142
      %s144 = sphi 0, %s142
      %s145 = sphi 0, %s144
      %s159 = sphi 0, %s145
      %s163 = sphi 0, %s163
      %s165 = sphi 0, %s163
      %s166 = sphi 0, %s165
      %s180 = sphi 0, %s166
      %s184 = sphi 0, %s184
      %s186 = sphi 0, %s184
      %s187 = sphi 0, %s186
      %s201 = sphi 0, %s187
      %s205 = sphi 0, %s205
      %s207 = sphi 0, %s205
      %s208 = sphi 0, %s207
      %s222 = sphi 0, %s208
      %s226 = sphi 0, %s226
      %s228 = sphi 0, %s226
      %s229 = sphi 0, %s228
      %s243 = sphi 0, %s229
      %s247 = sphi 0, %s247
      %s249 = sphi 0, %s247
      %s250 = sphi 0, %s249
      %s264 = sphi 0, %s250
      %s268 = sphi 0, %s268
      %s270 = sphi 0, %s268
      %s271 = sphi 0, %s270
      %s285 = sphi 0, %s271
      %s289 = sphi 0, %s289
      %s291 = sphi 0, %s289
      %s292 = sphi 0, %s291
      %s306 = sphi 0, %s292
      %s310 = sphi 0, %s310
      %s312 = sphi 0, %s310
      %s313 = sphi 0, %s312
      %s327 = sphi 0, %s313
      %s331 = sphi 0, %s331
      %s333 = sphi 0, %s331
      %s334 = sphi 0, %s333
      %s348 = sphi 0, %s334
      %s354 = sphi 0, %s356
      %s357 = sphi 0, %s354
      %s358 = sphi 0, %s357
      %s374 = sphi 0, %s358
    $region4: #{tpu_custom_call.1} parent=1 // loop_header_branch
      %27 = sbr.rel (%p25) target = $region8
    $region5: #{tpu_custom_call.1} parent=1 // loop_body
      %s29 = ssub.s32 %s24, 1
      %s30 = ssub.s32 %s24, 2
      %s31 = sadd.s32 %s24, 1
      %s32 = ssub.s32 %s24, %s31
      %p33 = scmp.eq.s32.totalorder %s32, 0
      %s35 = sadd.s32 %s34, 1
      %s36 = scalar_select %p33, %s34, %s35
      %p39 = pneg %p33
      %p40 = scmp.eq.s32.totalorder %s24, 2
      %p41 = por %p39, %p40
      %p42 = scmp.ne.s32.totalorder %s34, %s37
      %p43 = scmp.eq.s32.totalorder %s24, 0
      %p44 = por %p42, %p43
      %p45 = scmp.ne.s32.totalorder %s34, %s37
      %p46 = scmp.eq.s32.totalorder %s29, 2
      %p47 = por %p45, %p46
      %p48 = scmp.ne.s32.totalorder %s37, %s38
      %p49 = scmp.eq.s32.totalorder %s29, 0
      %p50 = por %p48, %p49
      %p51 = scmp.ne.s32.totalorder %s37, %s38
      %p52 = scmp.eq.s32.totalorder %s30, 2
      %p53 = por %p51, %p52
      %p55 = scmp.ne.s32.totalorder %s38, %s54
      %p56 = scmp.eq.s32.totalorder %s30, 0
      %p57 = por %p55, %p56
      %s59 = sadd.s32 %s58, 1
      %p62 = scmp.eq.s32.totalorder %s24, 2
      %p63 = scmp.ne.s32.totalorder %s58, %s60
      %p64 = scmp.eq.s32.totalorder %s24, 0
      %p65 = por %p63, %p64
      %p66 = scmp.ne.s32.totalorder %s58, %s60
      %p67 = scmp.eq.s32.totalorder %s29, 2
      %p68 = por %p66, %p67
      %p69 = scmp.ne.s32.totalorder %s60, %s61
      %p70 = scmp.eq.s32.totalorder %s29, 0
      %p71 = por %p69, %p70
      %p72 = scmp.ne.s32.totalorder %s60, %s61
      %p73 = scmp.eq.s32.totalorder %s30, 2
      %p74 = por %p72, %p73
      %p76 = scmp.ne.s32.totalorder %s61, %s75
      %p77 = scmp.eq.s32.totalorder %s30, 0
      %p78 = por %p76, %p77
      %s80 = sadd.s32 %s79, 1
      %p83 = scmp.eq.s32.totalorder %s24, 2
      %p84 = scmp.ne.s32.totalorder %s79, %s81
      %p85 = scmp.eq.s32.totalorder %s24, 0
      %p86 = por %p84, %p85
      %p87 = scmp.ne.s32.totalorder %s79, %s81
      %p88 = scmp.eq.s32.totalorder %s29, 2
      %p89 = por %p87, %p88
      %p90 = scmp.ne.s32.totalorder %s81, %s82
      %p91 = scmp.eq.s32.totalorder %s29, 0
      %p92 = por %p90, %p91
      %p93 = scmp.ne.s32.totalorder %s81, %s82
      %p94 = scmp.eq.s32.totalorder %s30, 2
      %p95 = por %p93, %p94
      %p97 = scmp.ne.s32.totalorder %s82, %s96
      %p98 = scmp.eq.s32.totalorder %s30, 0
      %p99 = por %p97, %p98
      %s101 = sadd.s32 %s100, 1
      %p104 = scmp.eq.s32.totalorder %s24, 2
      %p105 = scmp.ne.s32.totalorder %s100, %s102
      %p106 = scmp.eq.s32.totalorder %s24, 0
      %p107 = por %p105, %p106
      %p108 = scmp.ne.s32.totalorder %s100, %s102
      %p109 = scmp.eq.s32.totalorder %s29, 2
      %p110 = por %p108, %p109
      %p111 = scmp.ne.s32.totalorder %s102, %s103
      %p112 = scmp.eq.s32.totalorder %s29, 0
      %p113 = por %p111, %p112
      %p114 = scmp.ne.s32.totalorder %s102, %s103
      %p115 = scmp.eq.s32.totalorder %s30, 2
      %p116 = por %p114, %p115
      %p118 = scmp.ne.s32.totalorder %s103, %s117
      %p119 = scmp.eq.s32.totalorder %s30, 0
      %p120 = por %p118, %p119
      %s122 = sadd.s32 %s121, 1
      %p125 = scmp.eq.s32.totalorder %s24, 2
      %p126 = scmp.ne.s32.totalorder %s121, %s123
      %p127 = scmp.eq.s32.totalorder %s24, 0
      %p128 = por %p126, %p127
      %p129 = scmp.ne.s32.totalorder %s121, %s123
      %p130 = scmp.eq.s32.totalorder %s29, 2
      %p131 = por %p129, %p130
      %p132 = scmp.ne.s32.totalorder %s123, %s124
      %p133 = scmp.eq.s32.totalorder %s29, 0
      %p134 = por %p132, %p133
      %p135 = scmp.ne.s32.totalorder %s123, %s124
      %p136 = scmp.eq.s32.totalorder %s30, 2
      %p137 = por %p135, %p136
      %p139 = scmp.ne.s32.totalorder %s124, %s138
      %p140 = scmp.eq.s32.totalorder %s30, 0
      %p141 = por %p139, %p140
      %s143 = sadd.s32 %s142, 1
      %p146 = scmp.eq.s32.totalorder %s24, 2
      %p147 = scmp.ne.s32.totalorder %s142, %s144
      %p148 = scmp.eq.s32.totalorder %s24, 0
      %p149 = por %p147, %p148
      %p150 = scmp.ne.s32.totalorder %s142, %s144
      %p151 = scmp.eq.s32.totalorder %s29, 2
      %p152 = por %p150, %p151
      %p153 = scmp.ne.s32.totalorder %s144, %s145
      %p154 = scmp.eq.s32.totalorder %s29, 0
      %p155 = por %p153, %p154
      %p156 = scmp.ne.s32.totalorder %s144, %s145
      %p157 = scmp.eq.s32.totalorder %s30, 2
      %p158 = por %p156, %p157
      %p160 = scmp.ne.s32.totalorder %s145, %s159
      %p161 = scmp.eq.s32.totalorder %s30, 0
      %p162 = por %p160, %p161
      %s164 = sadd.s32 %s163, 1
      %p167 = scmp.eq.s32.totalorder %s24, 2
      %p168 = scmp.ne.s32.totalorder %s163, %s165
      %p169 = scmp.eq.s32.totalorder %s24, 0
      %p170 = por %p168, %p169
      %p171 = scmp.ne.s32.totalorder %s163, %s165
      %p172 = scmp.eq.s32.totalorder %s29, 2
      %p173 = por %p171, %p172
      %p174 = scmp.ne.s32.totalorder %s165, %s166
      %p175 = scmp.eq.s32.totalorder %s29, 0
      %p176 = por %p174, %p175
      %p177 = scmp.ne.s32.totalorder %s165, %s166
      %p178 = scmp.eq.s32.totalorder %s30, 2
      %p179 = por %p177, %p178
      %p181 = scmp.ne.s32.totalorder %s166, %s180
      %p182 = scmp.eq.s32.totalorder %s30, 0
      %p183 = por %p181, %p182
      %s185 = sadd.s32 %s184, 1
      %p188 = scmp.eq.s32.totalorder %s24, 2
      %p189 = scmp.ne.s32.totalorder %s184, %s186
      %p190 = scmp.eq.s32.totalorder %s24, 0
      %p191 = por %p189, %p190
      %p192 = scmp.ne.s32.totalorder %s184, %s186
      %p193 = scmp.eq.s32.totalorder %s29, 2
      %p194 = por %p192, %p193
      %p195 = scmp.ne.s32.totalorder %s186, %s187
      %p196 = scmp.eq.s32.totalorder %s29, 0
      %p197 = por %p195, %p196
      %p198 = scmp.ne.s32.totalorder %s186, %s187
      %p199 = scmp.eq.s32.totalorder %s30, 2
      %p200 = por %p198, %p199
      %p202 = scmp.ne.s32.totalorder %s187, %s201
      %p203 = scmp.eq.s32.totalorder %s30, 0
      %p204 = por %p202, %p203
      %s206 = sadd.s32 %s205, 1
      %p209 = scmp.eq.s32.totalorder %s24, 2
      %p210 = scmp.ne.s32.totalorder %s205, %s207
      %p211 = scmp.eq.s32.totalorder %s24, 0
      %p212 = por %p210, %p211
      %p213 = scmp.ne.s32.totalorder %s205, %s207
      %p214 = scmp.eq.s32.totalorder %s29, 2
      %p215 = por %p213, %p214
      %p216 = scmp.ne.s32.totalorder %s207, %s208
      %p217 = scmp.eq.s32.totalorder %s29, 0
      %p218 = por %p216, %p217
      %p219 = scmp.ne.s32.totalorder %s207, %s208
      %p220 = scmp.eq.s32.totalorder %s30, 2
      %p221 = por %p219, %p220
      %p223 = scmp.ne.s32.totalorder %s208, %s222
      %p224 = scmp.eq.s32.totalorder %s30, 0
      %p225 = por %p223, %p224
      %s227 = sadd.s32 %s226, 1
      %p230 = scmp.eq.s32.totalorder %s24, 2
      %p231 = scmp.ne.s32.totalorder %s226, %s228
      %p232 = scmp.eq.s32.totalorder %s24, 0
      %p233 = por %p231, %p232
      %p234 = scmp.ne.s32.totalorder %s226, %s228
      %p235 = scmp.eq.s32.totalorder %s29, 2
      %p236 = por %p234, %p235
      %p237 = scmp.ne.s32.totalorder %s228, %s229
      %p238 = scmp.eq.s32.totalorder %s29, 0
      %p239 = por %p237, %p238
      %p240 = scmp.ne.s32.totalorder %s228, %s229
      %p241 = scmp.eq.s32.totalorder %s30, 2
      %p242 = por %p240, %p241
      %p244 = scmp.ne.s32.totalorder %s229, %s243
      %p245 = scmp.eq.s32.totalorder %s30, 0
      %p246 = por %p244, %p245
      %s248 = sadd.s32 %s247, 1
      %p251 = scmp.eq.s32.totalorder %s24, 2
      %p252 = scmp.ne.s32.totalorder %s247, %s249
      %p253 = scmp.eq.s32.totalorder %s24, 0
      %p254 = por %p252, %p253
      %p255 = scmp.ne.s32.totalorder %s247, %s249
      %p256 = scmp.eq.s32.totalorder %s29, 2
      %p257 = por %p255, %p256
      %p258 = scmp.ne.s32.totalorder %s249, %s250
      %p259 = scmp.eq.s32.totalorder %s29, 0
      %p260 = por %p258, %p259
      %p261 = scmp.ne.s32.totalorder %s249, %s250
      %p262 = scmp.eq.s32.totalorder %s30, 2
      %p263 = por %p261, %p262
      %p265 = scmp.ne.s32.totalorder %s250, %s264
      %p266 = scmp.eq.s32.totalorder %s30, 0
      %p267 = por %p265, %p266
      %s269 = sadd.s32 %s268, 1
      %p272 = scmp.eq.s32.totalorder %s24, 2
      %p273 = scmp.ne.s32.totalorder %s268, %s270
      %p274 = scmp.eq.s32.totalorder %s24, 0
      %p275 = por %p273, %p274
      %p276 = scmp.ne.s32.totalorder %s268, %s270
      %p277 = scmp.eq.s32.totalorder %s29, 2
      %p278 = por %p276, %p277
      %p279 = scmp.ne.s32.totalorder %s270, %s271
      %p280 = scmp.eq.s32.totalorder %s29, 0
      %p281 = por %p279, %p280
      %p282 = scmp.ne.s32.totalorder %s270, %s271
      %p283 = scmp.eq.s32.totalorder %s30, 2
      %p284 = por %p282, %p283
      %p286 = scmp.ne.s32.totalorder %s271, %s285
      %p287 = scmp.eq.s32.totalorder %s30, 0
      %p288 = por %p286, %p287
      %s290 = sadd.s32 %s289, 1
      %p293 = scmp.eq.s32.totalorder %s24, 2
      %p294 = scmp.ne.s32.totalorder %s289, %s291
      %p295 = scmp.eq.s32.totalorder %s24, 0
      %p296 = por %p294, %p295
      %p297 = scmp.ne.s32.totalorder %s289, %s291
      %p298 = scmp.eq.s32.totalorder %s29, 2
      %p299 = por %p297, %p298
      %p300 = scmp.ne.s32.totalorder %s291, %s292
      %p301 = scmp.eq.s32.totalorder %s29, 0
      %p302 = por %p300, %p301
      %p303 = scmp.ne.s32.totalorder %s291, %s292
      %p304 = scmp.eq.s32.totalorder %s30, 2
      %p305 = por %p303, %p304
      %p307 = scmp.ne.s32.totalorder %s292, %s306
      %p308 = scmp.eq.s32.totalorder %s30, 0
      %p309 = por %p307, %p308
      %s311 = sadd.s32 %s310, 1
      %p314 = scmp.eq.s32.totalorder %s24, 2
      %p315 = scmp.ne.s32.totalorder %s310, %s312
      %p316 = scmp.eq.s32.totalorder %s24, 0
      %p317 = por %p315, %p316
      %p318 = scmp.ne.s32.totalorder %s310, %s312
      %p319 = scmp.eq.s32.totalorder %s29, 2
      %p320 = por %p318, %p319
      %p321 = scmp.ne.s32.totalorder %s312, %s313
      %p322 = scmp.eq.s32.totalorder %s29, 0
      %p323 = por %p321, %p322
      %p324 = scmp.ne.s32.totalorder %s312, %s313
      %p325 = scmp.eq.s32.totalorder %s30, 2
      %p326 = por %p324, %p325
      %p328 = scmp.ne.s32.totalorder %s313, %s327
      %p329 = scmp.eq.s32.totalorder %s30, 0
      %p330 = por %p328, %p329
      %s332 = sadd.s32 %s331, 1
      %p335 = scmp.eq.s32.totalorder %s24, 2
      %p336 = scmp.ne.s32.totalorder %s331, %s333
      %p337 = scmp.eq.s32.totalorder %s24, 0
      %p338 = por %p336, %p337
      %p339 = scmp.ne.s32.totalorder %s331, %s333
      %p340 = scmp.eq.s32.totalorder %s29, 2
      %p341 = por %p339, %p340
      %p342 = scmp.ne.s32.totalorder %s333, %s334
      %p343 = scmp.eq.s32.totalorder %s29, 0
      %p344 = por %p342, %p343
      %p345 = scmp.ne.s32.totalorder %s333, %s334
      %p346 = scmp.eq.s32.totalorder %s30, 2
      %p347 = por %p345, %p346
      %p349 = scmp.ne.s32.totalorder %s334, %s348
      %p350 = scmp.eq.s32.totalorder %s30, 0
      %p351 = por %p349, %p350
      %s352 = ssub.s32 %s24, %s31
      %p353 = scmp.eq.s32.totalorder %s352, 0
      %s355 = sadd.s32 %s354, 1
      %s356 = scalar_select %p353, %s354, %s355
      %p359 = pneg %p353
      %p360 = scmp.eq.s32.totalorder %s24, 2
      %p361 = por %p359, %p360
      %p362 = scmp.ne.s32.totalorder %s354, %s357
      %p363 = scmp.eq.s32.totalorder %s24, 0
      %p364 = por %p362, %p363
      %p365 = scmp.ne.s32.totalorder %s354, %s357
      %p366 = scmp.eq.s32.totalorder %s29, 2
      %p367 = por %p365, %p366
      %p368 = scmp.ne.s32.totalorder %s357, %s358
      %p369 = scmp.eq.s32.totalorder %s29, 0
      %p370 = por %p368, %p369
      %p371 = scmp.ne.s32.totalorder %s357, %s358
      %p372 = scmp.eq.s32.totalorder %s30, 2
      %p373 = por %p371, %p372
      %p375 = scmp.ne.s32.totalorder %s358, %s374
      %p376 = scmp.eq.s32.totalorder %s30, 0
      %p377 = por %p375, %p376
      %p378 = scmp.le.s32.totalorder 1, %s24
      %p379 = scmp.lt.s32.totalorder %s24, 4
      %p380 = pnand %p378, %p379
      %p381 = pneg %p380
      // Predicated region
      $region9: #{tpu_custom_call.1} parent=5 // pred_check
        _
      $region10: #{tpu_custom_call.1} parent=5 // pred_check_branch
        %383 = sbr.rel (%p380) target = $region12
      $region11: #{tpu_custom_call.1} parent=5 // pred_region
        %s384 = ssub.s32 %s24, 1
        // Predicated region
        $region13: #{tpu_custom_call.1} parent=11 // pred_check
          %p385 = pneg %p71
        $region14: #{tpu_custom_call.1} parent=11 // pred_check_branch
          %387 = sbr.rel (%p385) target = $region16
        $region15: #{tpu_custom_call.1} parent=11 // pred_region
          _
        $region16: #{tpu_custom_call.1} parent=11 // pred_fallthru
          _
        // Predicated region
        $region17: #{tpu_custom_call.1} parent=11 // pred_check
          %p388 = pneg %p92
        $region18: #{tpu_custom_call.1} parent=11 // pred_check_branch
          %390 = sbr.rel (%p388) target = $region20
        $region19: #{tpu_custom_call.1} parent=11 // pred_region
          _
        $region20: #{tpu_custom_call.1} parent=11 // pred_fallthru
          _
        // Predicated region
        $region21: #{tpu_custom_call.1} parent=11 // pred_check
          %p391 = pneg %p113
        $region22: #{tpu_custom_call.1} parent=11 // pred_check_branch
          %393 = sbr.rel (%p391) target = $region24
        $region23: #{tpu_custom_call.1} parent=11 // pred_region
          _
        $region24: #{tpu_custom_call.1} parent=11 // pred_fallthru
          _
        // Predicated region
        $region25: #{tpu_custom_call.1} parent=11 // pred_check
          %p394 = pneg %p134
        $region26: #{tpu_custom_call.1} parent=11 // pred_check_branch
          %396 = sbr.rel (%p394) target = $region28
        $region27: #{tpu_custom_call.1} parent=11 // pred_region
          _
        $region28: #{tpu_custom_call.1} parent=11 // pred_fallthru
          _
        // Predicated region
        $region29: #{tpu_custom_call.1} parent=11 // pred_check
          %p397 = pneg %p155
        $region30: #{tpu_custom_call.1} parent=11 // pred_check_branch
          %399 = sbr.rel (%p397) target = $region32
        $region31: #{tpu_custom_call.1} parent=11 // pred_region
          _
        $region32: #{tpu_custom_call.1} parent=11 // pred_fallthru
          _
        // Predicated region
        $region33: #{tpu_custom_call.1} parent=11 // pred_check
          %p400 = pneg %p176
        $region34: #{tpu_custom_call.1} parent=11 // pred_check_branch
          %402 = sbr.rel (%p400) target = $region36
        $region35: #{tpu_custom_call.1} parent=11 // pred_region
          _
        $region36: #{tpu_custom_call.1} parent=11 // pred_fallthru
          _
        // Predicated region
        $region37: #{tpu_custom_call.1} parent=11 // pred_check
          %p403 = pneg %p197
        $region38: #{tpu_custom_call.1} parent=11 // pred_check_branch
          %405 = sbr.rel (%p403) target = $region40
        $region39: #{tpu_custom_call.1} parent=11 // pred_region
          _
        $region40: #{tpu_custom_call.1} parent=11 // pred_fallthru
          _
        // Predicated region
        $region41: #{tpu_custom_call.1} parent=11 // pred_check
          %p406 = pneg %p218
        $region42: #{tpu_custom_call.1} parent=11 // pred_check_branch
          %408 = sbr.rel (%p406) target = $region44
        $region43: #{tpu_custom_call.1} parent=11 // pred_region
          _
        $region44: #{tpu_custom_call.1} parent=11 // pred_fallthru
          _
        // Predicated region
        $region45: #{tpu_custom_call.1} parent=11 // pred_check
          %p409 = pneg %p239
        $region46: #{tpu_custom_call.1} parent=11 // pred_check_branch
          %411 = sbr.rel (%p409) target = $region48
        $region47: #{tpu_custom_call.1} parent=11 // pred_region
          _
        $region48: #{tpu_custom_call.1} parent=11 // pred_fallthru
          _
        // Predicated region
        $region49: #{tpu_custom_call.1} parent=11 // pred_check
          %p412 = pneg %p260
        $region50: #{tpu_custom_call.1} parent=11 // pred_check_branch
          %414 = sbr.rel (%p412) target = $region52
        $region51: #{tpu_custom_call.1} parent=11 // pred_region
          _
        $region52: #{tpu_custom_call.1} parent=11 // pred_fallthru
          _
        // Predicated region
        $region53: #{tpu_custom_call.1} parent=11 // pred_check
          %p415 = pneg %p281
        $region54: #{tpu_custom_call.1} parent=11 // pred_check_branch
          %417 = sbr.rel (%p415) target = $region56
        $region55: #{tpu_custom_call.1} parent=11 // pred_region
          _
        $region56: #{tpu_custom_call.1} parent=11 // pred_fallthru
          _
        // Predicated region
        $region57: #{tpu_custom_call.1} parent=11 // pred_check
          %p418 = pneg %p302
        $region58: #{tpu_custom_call.1} parent=11 // pred_check_branch
          %420 = sbr.rel (%p418) target = $region60
        $region59: #{tpu_custom_call.1} parent=11 // pred_region
          _
        $region60: #{tpu_custom_call.1} parent=11 // pred_fallthru
          _
        // Predicated region
        $region61: #{tpu_custom_call.1} parent=11 // pred_check
          %p421 = pneg %p323
        $region62: #{tpu_custom_call.1} parent=11 // pred_check_branch
          %423 = sbr.rel (%p421) target = $region64
        $region63: #{tpu_custom_call.1} parent=11 // pred_region
          _
        $region64: #{tpu_custom_call.1} parent=11 // pred_fallthru
          _
        // Predicated region
        $region65: #{tpu_custom_call.1} parent=11 // pred_check
          %p424 = pneg %p344
        $region66: #{tpu_custom_call.1} parent=11 // pred_check_branch
          %426 = sbr.rel (%p424) target = $region68
        $region67: #{tpu_custom_call.1} parent=11 // pred_region
          _
        $region68: #{tpu_custom_call.1} parent=11 // pred_fallthru
          _
      $region12: #{tpu_custom_call.1} parent=5 // pred_fallthru
        _
      %p427 = scmp.lt.s32.totalorder %s24, 3
      // Predicated region
      $region69: #{tpu_custom_call.1} parent=5 // pred_check
        %p428 = pneg %p427
      $region70: #{tpu_custom_call.1} parent=5 // pred_check_branch
        %430 = sbr.rel (%p428) target = $region72
      $region71: #{tpu_custom_call.1} parent=5 // pred_region
        // Predicated region
        $region73: #{tpu_custom_call.1} parent=71 // pred_check
          %p431 = pneg %p44
        $region74: #{tpu_custom_call.1} parent=71 // pred_check_branch
          %433 = sbr.rel (%p431) target = $region76
        $region75: #{tpu_custom_call.1} parent=71 // pred_region
          %s434 = smul.u32 4, %s24
          %p435 = scmp.lt.s32.totalorder %s434, 11
          %s436 = scalar_select %p435, %s434, 11
          %s437 = smul.addr %s436, 8
          %s438 = scalar_lea.vmem %s0, %s437
          %s439 = smul.u32 4, %s24
        $region76: #{tpu_custom_call.1} parent=71 // pred_fallthru
          _
      $region72: #{tpu_custom_call.1} parent=5 // pred_fallthru
        _
      %p440 = scmp.le.s32.totalorder 1, %s24
      %p441 = scmp.lt.s32.totalorder %s24, 4
      %p442 = pnand %p440, %p441
      %p443 = pneg %p442
      // Predicated region
      $region77: #{tpu_custom_call.1} parent=5 // pred_check
        _
      $region78: #{tpu_custom_call.1} parent=5 // pred_check_branch
        %445 = sbr.rel (%p442) target = $region80
      $region79: #{tpu_custom_call.1} parent=5 // pred_region
        %s446 = ssub.s32 %s24, 1
        %s447 = smul.u32 4, %s29
        %p448 = scmp.lt.s32.totalorder %s447, 11
        %s449 = scalar_select %p448, %s447, 11
        %s450 = smul.addr %s449, 8
        %s451 = scalar_lea.vmem %s0, %s450
        %p452 = pneg %p50
        %p453 = pneg %p47
        %p454 = pneg %p71
        %p455 = pneg %p68
        %p456 = pneg %p92
        %p457 = pneg %p89
        %p458 = pneg %p113
        %p459 = pneg %p110
        %p460 = pneg %p134
        %p461 = pneg %p131
        %p462 = pneg %p155
        %p463 = pneg %p152
        %p464 = pneg %p176
        %p465 = pneg %p173
        %p466 = pneg %p197
        %p467 = pneg %p194
        %p468 = pneg %p218
        %p469 = pneg %p215
        %p470 = pneg %p239
        %p471 = pneg %p236
        %p472 = pneg %p260
        %p473 = pneg %p257
        %p474 = pneg %p281
        %p475 = pneg %p278
        %p476 = pneg %p302
        %p477 = pneg %p299
        %p478 = pneg %p323
        %p479 = pneg %p320
        %p480 = pneg %p344
        %p481 = pneg %p341
        %p482 = pneg %p370
        %p483 = pneg %p367
        %s484 = sand.u32 %s357, 1
        %s485 = scalar_lea.sflag [#allocation3], %s484
        %s486 = sand.u32 %s357, 1
        %s487 = smul.addr %s486, 32
        %s488 = scalar_lea.vmem [#allocation2], %s487
        %s489 = smul.u32 4, %s29
        %p490 = scmp.lt.s32.totalorder %s489, 11
        %s491 = scalar_select %p490, %s489, 11
        %s492 = smul.addr %s491, 8
        %s493 = scalar_lea.vmem %s0, %s492
        %s494 = smul.u32 4, %s29
        %s495 = smul.u32 4, %s29
        %v497 = vld [vmem:[%s493] sm:$0xff]
        %v498 = vld [vmem:[%s493 + $0x8] sm:$0xff]
        %v499 = vld [vmem:[%s493 + $0x10] sm:$0xff]
        %v500 = vld [vmem:[%s493 + $0x18] sm:$0xff]
        %v501 = vld [vmem:[%s1] sm:$0xf]
        %v502 = vld [vmem:[%s1 + $0x4] sm:$0xf]
        %v503 = vld [vmem:[%s1 + $0x8] sm:$0xf]
        %v504 = vld [vmem:[%s1 + $0xc] sm:$0xf]
        %v505 = vld [vmem:[%s1 + $0x10] sm:$0xf]
        %v506 = vld [vmem:[%s2] sm:$0x1]
        %v507 = vpack.c.bf16 %v498, %v497
        %v508 = vpack.c.bf16 %v500, %v499
        %v510 = vlaneseq
        %v511 = vshrl.u32 %v510, 7
        %v512 = vsub.s32 0, %v511
        %v513 = vrot.slane %v506, %v512
        %v520 = vunpack.c.l.b16 %v501
        %v521 = vunpack.c.l.b16 %v502
        %v522 = vunpack.c.l.b16 %v503
        %v523 = vunpack.c.l.b16 %v504
        %v524 = vunpack.c.l.b16 %v505
        %v525 = vpack.c.b16 %v521, %v520
        %v526 = vpack.c.b16 %v523, %v522
        %v527 = vpack.c.b16 %v524, %v524
        %vm530 = vcmask 326656
        %v532 = vsel %vm530, %v507, 0
        %v535 = vsel %vm530, %v508, 0
        %vm537 = vcmask 1043456
        %v539 = vsel %vm537, %v527, 0
        %541 = vmatprep.subr.bf16.mxu0 0
        %542 = vmatpush1.bf16.msra.mxu0 %v525
        %543 = vmatprep.subr.bf16.mxu0 0
        %544 = vmatpush1.bf16.msra.mxu0 %v526
        %545 = vmatprep.subr.bf16.mxu0 0
        %546 = vmatpush1.bf16.msra.mxu0 %v539
        %547 = vmatprep.subr.bf16.mxu0 0
        %548 = vmatpush1.bf16.msra.mxu0 0
        %549 = vmatprep.subr.bf16.mxu0 0
        %550 = vmatpush1.bf16.msra.mxu0 0
        %551 = vmatprep.subr.bf16.mxu0 0
        %552 = vmatpush1.bf16.msra.mxu0 0
        %553 = vmatprep.subr.bf16.mxu0 0
        %554 = vmatpush1.bf16.msra.mxu0 0
        %555 = vmatprep.subr.bf16.mxu0 0
        %556 = vmatpush1.bf16.msra.mxu0 0
        %557 = vmatprep.subr.bf16.mxu0 0
        %558 = vmatpush1.bf16.msra.mxu0 0
        %559 = vmatprep.subr.bf16.mxu0 0
        %560 = vmatpush1.bf16.msra.mxu0 0
        %561 = vmatprep.subr.bf16.mxu0 0
        %562 = vmatpush1.bf16.msra.mxu0 0
        %563 = vmatprep.subr.bf16.mxu0 0
        %564 = vmatpush1.bf16.msra.mxu0 0
        %565 = vmatprep.subr.bf16.mxu0 0
        %566 = vmatpush1.bf16.msra.mxu0 0
        %567 = vmatprep.subr.bf16.mxu0 0
        %568 = vmatpush1.bf16.msra.mxu0 0
        %569 = vmatprep.subr.bf16.mxu0 0
        %570 = vmatpush1.bf16.msra.mxu0 0
        %571 = vmatprep.subr.bf16.mxu0 0
        %572 = vmatpush1.bf16.msra.mxu0 0
        %573 = vmatprep.mubr.bf16.mxu0 0
        %574 = vmatmul.mubr.bf16.gmra.mrb[0].mxu0 %v532
        %v575 = vpop.f32.mrb[0].mxu0
        %v576 = vadd.f32 %v513, %v575
        %v577 = vpop.f32.mrb[0].mxu0
        %v578 = vpop.f32.mrb[0].mxu0
        %v579 = vadd.f32 %v513, %v578
        %v580 = vpop.f32.mrb[0].mxu0
        %581 = vmatprep.mubr.bf16.mxu0 0
        %582 = vmatmul.mubr.bf16.gmra.mrb[0].mxu0 %v535
        %v583 = vpop.f32.mrb[0].mxu0
        %v584 = vadd.f32 %v513, %v583
        %v585 = vpop.f32.mrb[0].mxu0
        %v586 = vpop.f32.mrb[0].mxu0
        %v587 = vadd.f32 %v513, %v586
        %v588 = vpop.f32.mrb[0].mxu0
        %589 = vdwg.mxu0
        %v590 = vld [vmem:[%s3] sm:$0x1]
        %v591 = vld [vmem:[%s4] sm:$0x1]
        %v592 = vlaneseq
        %v593 = vand.u32 %v592, 127
        %vm594 = vcmp.lt.s32.totalorder %v593, 64
        %v595 = vsel %vm594, %v576, 0.0
        %v596 = vsel %vm594, %v579, 0.0
        %v597 = vsel %vm594, %v584, 0.0
        %v598 = vsel %vm594, %v587, 0.0
        %599 = vadd.xlane.f32.xlu0 %v595
        %v600 = vpop.xlane.xlu0 %599
        %601 = vadd.xlane.f32.xlu0 %v596
        %v602 = vpop.xlane.xlu0 %601
        %603 = vadd.xlane.f32.xlu0 %v597
        %v604 = vpop.xlane.xlu0 %603
        %605 = vadd.xlane.f32.xlu0 %v598
        %v606 = vpop.xlane.xlu0 %605
        %607 = vadd.xlane.f32.xlu0 %v576
        %v608 = vpop.xlane.xlu0 %607
        %609 = vadd.xlane.f32.xlu0 %v579
        %v610 = vpop.xlane.xlu0 %609
        %611 = vadd.xlane.f32.xlu0 %v584
        %v612 = vpop.xlane.xlu0 %611
        %613 = vadd.xlane.f32.xlu0 %v587
        %v614 = vpop.xlane.xlu0 %613
        %v615 = vsub.f32 %v608, %v600
        %v616 = vsub.f32 %v610, %v602
        %v617 = vsub.f32 %v612, %v604
        %v618 = vsub.f32 %v614, %v606
        %v619 = vsel %vm594, %v600, %v615
        %v620 = vsel %vm594, %v602, %v616
        %v621 = vsel %vm594, %v604, %v617
        %v622 = vsel %vm594, %v606, %v618
        %v623 = vmul.f32 %v619, 0.015625
        %v624 = vmul.f32 %v620, 0.015625
        %v625 = vmul.f32 %v621, 0.015625
        %v626 = vmul.f32 %v622, 0.015625
        %v627 = vmul.f32 %v576, %v576
        %v628 = vmul.f32 %v579, %v579
        %v629 = vmul.f32 %v584, %v584
        %v630 = vmul.f32 %v587, %v587
        %v631 = vsel %vm594, %v627, 0.0
        %v632 = vsel %vm594, %v628, 0.0
        %v633 = vsel %vm594, %v629, 0.0
        %v634 = vsel %vm594, %v630, 0.0
        %635 = vadd.xlane.f32.xlu0 %v631
        %v636 = vpop.xlane.xlu0 %635
        %637 = vadd.xlane.f32.xlu0 %v632
        %v638 = vpop.xlane.xlu0 %637
        %639 = vadd.xlane.f32.xlu0 %v633
        %v640 = vpop.xlane.xlu0 %639
        %641 = vadd.xlane.f32.xlu0 %v634
        %v642 = vpop.xlane.xlu0 %641
        %643 = vadd.xlane.f32.xlu0 %v627
        %v644 = vpop.xlane.xlu0 %643
        %645 = vadd.xlane.f32.xlu0 %v628
        %v646 = vpop.xlane.xlu0 %645
        %647 = vadd.xlane.f32.xlu0 %v629
        %v648 = vpop.xlane.xlu0 %647
        %649 = vadd.xlane.f32.xlu0 %v630
        %v650 = vpop.xlane.xlu0 %649
        %v651 = vsub.f32 %v644, %v636
        %v652 = vsub.f32 %v646, %v638
        %v653 = vsub.f32 %v648, %v640
        %v654 = vsub.f32 %v650, %v642
        %v655 = vsel %vm594, %v636, %v651
        %v656 = vsel %vm594, %v638, %v652
        %v657 = vsel %vm594, %v640, %v653
        %v658 = vsel %vm594, %v642, %v654
        %v659 = vmul.f32 %v655, 0.015625
        %v660 = vmul.f32 %v656, 0.015625
        %v661 = vmul.f32 %v657, 0.015625
        %v662 = vmul.f32 %v658, 0.015625
        %v663 = vmul.f32 %v623, %v623
        %v664 = vmul.f32 %v624, %v624
        %v665 = vmul.f32 %v625, %v625
        %v666 = vmul.f32 %v626, %v626
        %v667 = vsub.f32 %v659, %v663
        %v668 = vsub.f32 %v660, %v664
        %v669 = vsub.f32 %v661, %v665
        %v670 = vsub.f32 %v662, %v666
        %v671 = vsub.f32 %v576, %v623
        %v672 = vsub.f32 %v579, %v624
        %v673 = vsub.f32 %v584, %v625
        %v674 = vsub.f32 %v587, %v626
        %v675 = vadd.f32 %v667, 1e-05
        %v676 = vadd.f32 %v668, 1e-05
        %v677 = vadd.f32 %v669, 1e-05
        %v678 = vadd.f32 %v670, 1e-05
        %v679 = vrsqrt.pop %v675
        %v680 = vrsqrt.pop %v676
        %v681 = vrsqrt.pop %v677
        %v682 = vrsqrt.pop %v678
        %v683 = vmul.f32 %v671, %v679
        %v684 = vmul.f32 %v672, %v680
        %v685 = vmul.f32 %v673, %v681
        %v686 = vmul.f32 %v674, %v682
        %v688 = vlaneseq
        %v689 = vshrl.u32 %v688, 7
        %v690 = vsub.s32 0, %v689
        %v691 = vrot.slane %v590, %v690
        %v693 = vmul.f32 %v683, %v691
        %v694 = vmul.f32 %v684, %v691
        %v695 = vmul.f32 %v685, %v691
        %v696 = vmul.f32 %v686, %v691
        %v698 = vlaneseq
        %v699 = vshrl.u32 %v698, 7
        %v700 = vsub.s32 0, %v699
        %v701 = vrot.slane %v591, %v700
        %v703 = vadd.f32 %v693, %v701
        %v704 = vadd.f32 %v694, %v701
        %v705 = vadd.f32 %v695, %v701
        %v706 = vadd.f32 %v696, %v701
        %v707 = vtanh.pop %v703
        %v708 = vtanh.pop %v704
        %v709 = vtanh.pop %v705
        %v710 = vtanh.pop %v706
        %v711 = vld [vmem:[%s5] sm:$0xf]
        %v712 = vld [vmem:[%s5 + $0x4] sm:$0xf]
        %v713 = vld [vmem:[%s5 + $0x8] sm:$0xf]
        %v714 = vld [vmem:[%s5 + $0xc] sm:$0xf]
        %v715 = vld [vmem:[%s5 + $0x10] sm:$0xf]
        %v716 = vld [vmem:[%s5 + $0x14] sm:$0xf]
        %v717 = vld [vmem:[%s5 + $0x18] sm:$0xf]
        %v718 = vld [vmem:[%s5 + $0x1c] sm:$0xf]
        %v719 = vld [vmem:[%s5 + $0x20] sm:$0xf]
        %v720 = vld [vmem:[%s5 + $0x24] sm:$0xf]
        %v721 = vld [vmem:[%s5 + $0x28] sm:$0xf]
        %v722 = vld [vmem:[%s5 + $0x2c] sm:$0xf]
        %v723 = vld [vmem:[%s5 + $0x30] sm:$0xf]
        %v724 = vld [vmem:[%s5 + $0x34] sm:$0xf]
        %v725 = vld [vmem:[%s5 + $0x38] sm:$0xf]
        %v726 = vld [vmem:[%s5 + $0x3c] sm:$0xf]
        %v727 = vld [vmem:[%s6] sm:$0x1]
        %v728 = vpack.c.bf16 %v708, %v707
        %v729 = vpack.c.bf16 %v710, %v709
        %v731 = vlaneseq
        %v732 = vshrl.u32 %v731, 7
        %v733 = vsub.s32 0, %v732
        %v734 = vrot.slane %v727, %v733
        %v752 = vunpack.c.l.b16 %v711
        %v753 = vunpack.c.l.b16 %v712
        %v754 = vunpack.c.l.b16 %v713
        %v755 = vunpack.c.l.b16 %v714
        %v756 = vunpack.c.l.b16 %v715
        %v757 = vunpack.c.l.b16 %v716
        %v758 = vunpack.c.l.b16 %v717
        %v759 = vunpack.c.l.b16 %v718
        %v760 = vunpack.c.l.b16 %v719
        %v761 = vunpack.c.l.b16 %v720
        %v762 = vunpack.c.l.b16 %v721
        %v763 = vunpack.c.l.b16 %v722
        %v764 = vunpack.c.l.b16 %v723
        %v765 = vunpack.c.l.b16 %v724
        %v766 = vunpack.c.l.b16 %v725
        %v767 = vunpack.c.l.b16 %v726
        %v768 = vpack.c.b16 %v753, %v752
        %v769 = vpack.c.b16 %v755, %v754
        %v770 = vpack.c.b16 %v757, %v756
        %v771 = vpack.c.b16 %v759, %v758
        %v772 = vpack.c.b16 %v761, %v760
        %v773 = vpack.c.b16 %v763, %v762
        %v774 = vpack.c.b16 %v765, %v764
        %v775 = vpack.c.b16 %v767, %v766
        %784 = vmatprep.subr.bf16.mxu0 0
        %785 = vmatpush1.bf16.msra.mxu0 %v768
        %786 = vmatprep.subr.bf16.mxu0 0
        %787 = vmatpush1.bf16.msra.mxu0 %v769
        %788 = vmatprep.subr.bf16.mxu0 0
        %789 = vmatpush1.bf16.msra.mxu0 %v770
        %790 = vmatprep.subr.bf16.mxu0 0
        %791 = vmatpush1.bf16.msra.mxu0 %v771
        %792 = vmatprep.subr.bf16.mxu0 0
        %793 = vmatpush1.bf16.msra.mxu0 %v772
        %794 = vmatprep.subr.bf16.mxu0 0
        %795 = vmatpush1.bf16.msra.mxu0 %v773
        %796 = vmatprep.subr.bf16.mxu0 0
        %797 = vmatpush1.bf16.msra.mxu0 %v774
        %798 = vmatprep.subr.bf16.mxu0 0
        %799 = vmatpush1.bf16.msra.mxu0 %v775
        %800 = vmatprep.subr.bf16.mxu0 0
        %801 = vmatpush1.bf16.msra.mxu0 0
        %802 = vmatprep.subr.bf16.mxu0 0
        %803 = vmatpush1.bf16.msra.mxu0 0
        %804 = vmatprep.subr.bf16.mxu0 0
        %805 = vmatpush1.bf16.msra.mxu0 0
        %806 = vmatprep.subr.bf16.mxu0 0
        %807 = vmatpush1.bf16.msra.mxu0 0
        %808 = vmatprep.subr.bf16.mxu0 0
        %809 = vmatpush1.bf16.msra.mxu0 0
        %810 = vmatprep.subr.bf16.mxu0 0
        %811 = vmatpush1.bf16.msra.mxu0 0
        %812 = vmatprep.subr.bf16.mxu0 0
        %813 = vmatpush1.bf16.msra.mxu0 0
        %814 = vmatprep.subr.bf16.mxu0 0
        %815 = vmatpush1.bf16.msra.mxu0 0
        %816 = vmatprep.mubr.bf16.mxu0 0
        %817 = vmatmul.mubr.bf16.gmra.mrb[0].mxu0 %v728
        %v818 = vpop.f32.mrb[0].mxu0
        %v819 = vadd.f32 %v734, %v818
        %v820 = vpop.f32.mrb[0].mxu0
        %v821 = vpop.f32.mrb[0].mxu0
        %v822 = vadd.f32 %v734, %v821
        %v823 = vpop.f32.mrb[0].mxu0
        %824 = vmatprep.mubr.bf16.mxu0 0
        %825 = vmatmul.mubr.bf16.gmra.mrb[0].mxu0 %v729
        %v826 = vpop.f32.mrb[0].mxu0
        %v827 = vadd.f32 %v734, %v826
        %v828 = vpop.f32.mrb[0].mxu0
        %v829 = vpop.f32.mrb[0].mxu0
        %v830 = vadd.f32 %v734, %v829
        %v831 = vpop.f32.mrb[0].mxu0
        %832 = vdwg.mxu0
        %v833 = vmax.f32 %v819, 0.0
        %v834 = vmax.f32 %v822, 0.0
        %v835 = vmax.f32 %v827, 0.0
        %v836 = vmax.f32 %v830, 0.0
        %v837 = vld [vmem:[%s7] sm:$0xf]
        %v838 = vld [vmem:[%s7 + $0x4] sm:$0xf]
        %v839 = vld [vmem:[%s7 + $0x8] sm:$0xf]
        %v840 = vld [vmem:[%s7 + $0xc] sm:$0xf]
        %v841 = vld [vmem:[%s7 + $0x10] sm:$0xf]
        %v842 = vld [vmem:[%s7 + $0x14] sm:$0xf]
        %v843 = vld [vmem:[%s7 + $0x18] sm:$0xf]
        %v844 = vld [vmem:[%s7 + $0x1c] sm:$0xf]
        %v845 = vld [vmem:[%s7 + $0x20] sm:$0xf]
        %v846 = vld [vmem:[%s7 + $0x24] sm:$0xf]
        %v847 = vld [vmem:[%s7 + $0x28] sm:$0xf]
        %v848 = vld [vmem:[%s7 + $0x2c] sm:$0xf]
        %v849 = vld [vmem:[%s7 + $0x30] sm:$0xf]
        %v850 = vld [vmem:[%s7 + $0x34] sm:$0xf]
        %v851 = vld [vmem:[%s7 + $0x38] sm:$0xf]
        %v852 = vld [vmem:[%s7 + $0x3c] sm:$0xf]
        %v853 = vld [vmem:[%s8] sm:$0x1]
        %v854 = vpack.c.bf16 %v834, %v833
        %v855 = vpack.c.bf16 %v836, %v835
        %v857 = vlaneseq
        %v858 = vshrl.u32 %v857, 7
        %v859 = vsub.s32 0, %v858
        %v860 = vrot.slane %v853, %v859
        %v878 = vunpack.c.l.b16 %v837
        %v879 = vunpack.c.l.b16 %v838
        %v880 = vunpack.c.l.b16 %v839
        %v881 = vunpack.c.l.b16 %v840
        %v882 = vunpack.c.l.b16 %v841
        %v883 = vunpack.c.l.b16 %v842
        %v884 = vunpack.c.l.b16 %v843
        %v885 = vunpack.c.l.b16 %v844
        %v886 = vunpack.c.l.b16 %v845
        %v887 = vunpack.c.l.b16 %v846
        %v888 = vunpack.c.l.b16 %v847
        %v889 = vunpack.c.l.b16 %v848
        %v890 = vunpack.c.l.b16 %v849
        %v891 = vunpack.c.l.b16 %v850
        %v892 = vunpack.c.l.b16 %v851
        %v893 = vunpack.c.l.b16 %v852
        %v894 = vpack.c.b16 %v879, %v878
        %v895 = vpack.c.b16 %v881, %v880
        %v896 = vpack.c.b16 %v883, %v882
        %v897 = vpack.c.b16 %v885, %v884
        %v898 = vpack.c.b16 %v887, %v886
        %v899 = vpack.c.b16 %v889, %v888
        %v900 = vpack.c.b16 %v891, %v890
        %v901 = vpack.c.b16 %v893, %v892
        %910 = vmatprep.subr.bf16.mxu0 0
        %911 = vmatpush1.bf16.msra.mxu0 %v894
        %912 = vmatprep.subr.bf16.mxu0 0
        %913 = vmatpush1.bf16.msra.mxu0 %v895
        %914 = vmatprep.subr.bf16.mxu0 0
        %915 = vmatpush1.bf16.msra.mxu0 %v896
        %916 = vmatprep.subr.bf16.mxu0 0
        %917 = vmatpush1.bf16.msra.mxu0 %v897
        %918 = vmatprep.subr.bf16.mxu0 0
        %919 = vmatpush1.bf16.msra.mxu0 %v898
        %920 = vmatprep.subr.bf16.mxu0 0
        %921 = vmatpush1.bf16.msra.mxu0 %v899
        %922 = vmatprep.subr.bf16.mxu0 0
        %923 = vmatpush1.bf16.msra.mxu0 %v900
        %924 = vmatprep.subr.bf16.mxu0 0
        %925 = vmatpush1.bf16.msra.mxu0 %v901
        %926 = vmatprep.subr.bf16.mxu0 0
        %927 = vmatpush1.bf16.msra.mxu0 0
        %928 = vmatprep.subr.bf16.mxu0 0
        %929 = vmatpush1.bf16.msra.mxu0 0
        %930 = vmatprep.subr.bf16.mxu0 0
        %931 = vmatpush1.bf16.msra.mxu0 0
        %932 = vmatprep.subr.bf16.mxu0 0
        %933 = vmatpush1.bf16.msra.mxu0 0
        %934 = vmatprep.subr.bf16.mxu0 0
        %935 = vmatpush1.bf16.msra.mxu0 0
        %936 = vmatprep.subr.bf16.mxu0 0
        %937 = vmatpush1.bf16.msra.mxu0 0
        %938 = vmatprep.subr.bf16.mxu0 0
        %939 = vmatpush1.bf16.msra.mxu0 0
        %940 = vmatprep.subr.bf16.mxu0 0
        %941 = vmatpush1.bf16.msra.mxu0 0
        %942 = vmatprep.mubr.bf16.mxu0 0
        %943 = vmatmul.mubr.bf16.gmra.mrb[0].mxu0 %v854
        %v944 = vpop.f32.mrb[0].mxu0
        %v945 = vadd.f32 %v860, %v944
        %v946 = vpop.f32.mrb[0].mxu0
        %v947 = vpop.f32.mrb[0].mxu0
        %v948 = vadd.f32 %v860, %v947
        %v949 = vpop.f32.mrb[0].mxu0
        %950 = vmatprep.mubr.bf16.mxu0 0
        %951 = vmatmul.mubr.bf16.gmra.mrb[0].mxu0 %v855
        %v952 = vpop.f32.mrb[0].mxu0
        %v953 = vadd.f32 %v860, %v952
        %v954 = vpop.f32.mrb[0].mxu0
        %v955 = vpop.f32.mrb[0].mxu0
        %v956 = vadd.f32 %v860, %v955
        %v957 = vpop.f32.mrb[0].mxu0
        %958 = vdwg.mxu0
        %v959 = vmax.f32 %v945, 0.0
        %v960 = vmax.f32 %v948, 0.0
        %v961 = vmax.f32 %v953, 0.0
        %v962 = vmax.f32 %v956, 0.0
        %v963 = vld [vmem:[%s9] sm:$0xf]
        %v964 = vld [vmem:[%s9 + $0x4] sm:$0xf]
        %v965 = vld [vmem:[%s9 + $0x8] sm:$0xf]
        %v966 = vld [vmem:[%s9 + $0xc] sm:$0xf]
        %v967 = vld [vmem:[%s9 + $0x10] sm:$0xf]
        %v968 = vld [vmem:[%s9 + $0x14] sm:$0xf]
        %v969 = vld [vmem:[%s9 + $0x18] sm:$0xf]
        %v970 = vld [vmem:[%s9 + $0x1c] sm:$0xf]
        %v971 = vld [vmem:[%s10] sm:$0x1]
        %v972 = vpack.c.bf16 %v960, %v959
        %v973 = vpack.c.bf16 %v962, %v961
        %v975 = vlaneseq
        %v976 = vshrl.u32 %v975, 7
        %v977 = vsub.s32 0, %v976
        %v978 = vrot.slane %v971, %v977
        %v988 = vunpack.c.l.b16 %v963
        %v989 = vunpack.c.l.b16 %v964
        %v990 = vunpack.c.l.b16 %v965
        %v991 = vunpack.c.l.b16 %v966
        %v992 = vunpack.c.l.b16 %v967
        %v993 = vunpack.c.l.b16 %v968
        %v994 = vunpack.c.l.b16 %v969
        %v995 = vunpack.c.l.b16 %v970
        %v996 = vpack.c.b16 %v989, %v988
        %v997 = vpack.c.b16 %v991, %v990
        %v998 = vpack.c.b16 %v993, %v992
        %v999 = vpack.c.b16 %v995, %v994
        %vm1004 = vcmask 523264
        %v1006 = vsel %vm1004, %v972, 0
        %v1009 = vsel %vm1004, %v973, 0
        %1011 = vmatprep.subr.bf16.mxu0 0
        %1012 = vmatpush1.bf16.msra.mxu0 %v996
        %1013 = vmatprep.subr.bf16.mxu0 0
        %1014 = vmatpush1.bf16.msra.mxu0 %v997
        %1015 = vmatprep.subr.bf16.mxu0 0
        %1016 = vmatpush1.bf16.msra.mxu0 %v998
        %1017 = vmatprep.subr.bf16.mxu0 0
        %1018 = vmatpush1.bf16.msra.mxu0 %v999
        %1019 = vmatprep.subr.bf16.mxu0 0
        %1020 = vmatpush1.bf16.msra.mxu0 0
        %1021 = vmatprep.subr.bf16.mxu0 0
        %1022 = vmatpush1.bf16.msra.mxu0 0
        %1023 = vmatprep.subr.bf16.mxu0 0
        %1024 = vmatpush1.bf16.msra.mxu0 0
        %1025 = vmatprep.subr.bf16.mxu0 0
        %1026 = vmatpush1.bf16.msra.mxu0 0
        %1027 = vmatprep.subr.bf16.mxu0 0
        %1028 = vmatpush1.bf16.msra.mxu0 0
        %1029 = vmatprep.subr.bf16.mxu0 0
        %1030 = vmatpush1.bf16.msra.mxu0 0
        %1031 = vmatprep.subr.bf16.mxu0 0
        %1032 = vmatpush1.bf16.msra.mxu0 0
        %1033 = vmatprep.subr.bf16.mxu0 0
        %1034 = vmatpush1.bf16.msra.mxu0 0
        %1035 = vmatprep.subr.bf16.mxu0 0
        %1036 = vmatpush1.bf16.msra.mxu0 0
        %1037 = vmatprep.subr.bf16.mxu0 0
        %1038 = vmatpush1.bf16.msra.mxu0 0
        %1039 = vmatprep.subr.bf16.mxu0 0
        %1040 = vmatpush1.bf16.msra.mxu0 0
        %1041 = vmatprep.subr.bf16.mxu0 0
        %1042 = vmatpush1.bf16.msra.mxu0 0
        %1043 = vmatprep.mubr.bf16.mxu0 0
        %1044 = vmatmul.mubr.bf16.gmra.mrb[0].mxu0 %v1006
        %v1045 = vpop.f32.mrb[0].mxu0
        %v1046 = vadd.f32 %v978, %v1045
        %v1047 = vpop.f32.mrb[0].mxu0
        %v1048 = vpop.f32.mrb[0].mxu0
        %v1049 = vadd.f32 %v978, %v1048
        %v1050 = vpop.f32.mrb[0].mxu0
        %1051 = vmatprep.mubr.bf16.mxu0 0
        %1052 = vmatmul.mubr.bf16.gmra.mrb[0].mxu0 %v1009
        %v1053 = vpop.f32.mrb[0].mxu0
        %v1054 = vadd.f32 %v978, %v1053
        %v1055 = vpop.f32.mrb[0].mxu0
        %v1056 = vpop.f32.mrb[0].mxu0
        %v1057 = vadd.f32 %v978, %v1056
        %v1058 = vpop.f32.mrb[0].mxu0
        %1059 = vdwg.mxu0
        %v1060 = vmax.f32 %v1046, 0.0
        %v1061 = vmax.f32 %v1049, 0.0
        %v1062 = vmax.f32 %v1054, 0.0
        %v1063 = vmax.f32 %v1057, 0.0
        %v1064 = vld [vmem:[%s11] sm:$0xf]
        %v1065 = vld [vmem:[%s11 + $0x4] sm:$0xf]
        %v1066 = vld [vmem:[%s11 + $0x8] sm:$0xf]
        %v1067 = vld [vmem:[%s11 + $0xc] sm:$0xf]
        %v1068 = vld [vmem:[%s11 + $0x10] sm:$0xf]
        %v1069 = vld [vmem:[%s11 + $0x14] sm:$0xf]
        %v1070 = vld [vmem:[%s11 + $0x18] sm:$0xf]
        %v1071 = vld [vmem:[%s11 + $0x1c] sm:$0xf]
        %v1072 = vld [vmem:[%s12] sm:$0x1]
        %v1073 = vpack.c.bf16 %v1061, %v1060
        %v1074 = vpack.c.bf16 %v1063, %v1062
        %v1076 = vlaneseq
        %v1077 = vshrl.u32 %v1076, 7
        %v1078 = vsub.s32 0, %v1077
        %v1079 = vrot.slane %v1072, %v1078
        %v1089 = vunpack.c.l.b16 %v1064
        %v1090 = vunpack.c.l.b16 %v1065
        %v1091 = vunpack.c.l.b16 %v1066
        %v1092 = vunpack.c.l.b16 %v1067
        %v1093 = vunpack.c.l.b16 %v1068
        %v1094 = vunpack.c.l.b16 %v1069
        %v1095 = vunpack.c.l.b16 %v1070
        %v1096 = vunpack.c.l.b16 %v1071
        %v1097 = vpack.c.b16 %v1090, %v1089
        %v1098 = vpack.c.b16 %v1092, %v1091
        %v1099 = vpack.c.b16 %v1094, %v1093
        %v1100 = vpack.c.b16 %v1096, %v1095
        %v1106 = vsel %vm1004, %v1073, 0
        %v1109 = vsel %vm1004, %v1074, 0
        %1111 = vmatprep.subr.bf16.mxu0 0
        %1112 = vmatpush1.bf16.msra.mxu0 %v1097
        %1113 = vmatprep.subr.bf16.mxu0 0
        %1114 = vmatpush1.bf16.msra.mxu0 %v1098
        %1115 = vmatprep.subr.bf16.mxu0 0
        %1116 = vmatpush1.bf16.msra.mxu0 %v1099
        %1117 = vmatprep.subr.bf16.mxu0 0
        %1118 = vmatpush1.bf16.msra.mxu0 %v1100
        %1119 = vmatprep.subr.bf16.mxu0 0
        %1120 = vmatpush1.bf16.msra.mxu0 0
        %1121 = vmatprep.subr.bf16.mxu0 0
        %1122 = vmatpush1.bf16.msra.mxu0 0
        %1123 = vmatprep.subr.bf16.mxu0 0
        %1124 = vmatpush1.bf16.msra.mxu0 0
        %1125 = vmatprep.subr.bf16.mxu0 0
        %1126 = vmatpush1.bf16.msra.mxu0 0
        %1127 = vmatprep.subr.bf16.mxu0 0
        %1128 = vmatpush1.bf16.msra.mxu0 0
        %1129 = vmatprep.subr.bf16.mxu0 0
        %1130 = vmatpush1.bf16.msra.mxu0 0
        %1131 = vmatprep.subr.bf16.mxu0 0
        %1132 = vmatpush1.bf16.msra.mxu0 0
        %1133 = vmatprep.subr.bf16.mxu0 0
        %1134 = vmatpush1.bf16.msra.mxu0 0
        %1135 = vmatprep.subr.bf16.mxu0 0
        %1136 = vmatpush1.bf16.msra.mxu0 0
        %1137 = vmatprep.subr.bf16.mxu0 0
        %1138 = vmatpush1.bf16.msra.mxu0 0
        %1139 = vmatprep.subr.bf16.mxu0 0
        %1140 = vmatpush1.bf16.msra.mxu0 0
        %1141 = vmatprep.subr.bf16.mxu0 0
        %1142 = vmatpush1.bf16.msra.mxu0 0
        %1143 = vmatprep.mubr.bf16.mxu0 0
        %1144 = vmatmul.mubr.bf16.gmra.mrb[0].mxu0 %v1106
        %v1145 = vpop.f32.mrb[0].mxu0
        %v1146 = vadd.f32 %v1079, %v1145
        %v1147 = vpop.f32.mrb[0].mxu0
        %v1148 = vpop.f32.mrb[0].mxu0
        %v1149 = vadd.f32 %v1079, %v1148
        %v1150 = vpop.f32.mrb[0].mxu0
        %1151 = vmatprep.mubr.bf16.mxu0 0
        %1152 = vmatmul.mubr.bf16.gmra.mrb[0].mxu0 %v1109
        %v1153 = vpop.f32.mrb[0].mxu0
        %v1154 = vadd.f32 %v1079, %v1153
        %v1155 = vpop.f32.mrb[0].mxu0
        %v1156 = vpop.f32.mrb[0].mxu0
        %v1157 = vadd.f32 %v1079, %v1156
        %v1158 = vpop.f32.mrb[0].mxu0
        %1159 = vdwg.mxu0
        %v1160 = vmax.f32 %v1146, 0.0
        %v1161 = vmax.f32 %v1149, 0.0
        %v1162 = vmax.f32 %v1154, 0.0
        %v1163 = vmax.f32 %v1157, 0.0
        %v1164 = vld [vmem:[%s13] sm:$0xf]
        %v1165 = vld [vmem:[%s13 + $0x4] sm:$0xf]
        %v1166 = vld [vmem:[%s13 + $0x8] sm:$0xf]
        %v1167 = vld [vmem:[%s13 + $0xc] sm:$0xf]
        %v1168 = vld [vmem:[%s13 + $0x10] sm:$0xf]
        %v1169 = vld [vmem:[%s13 + $0x14] sm:$0xf]
        %v1170 = vld [vmem:[%s13 + $0x18] sm:$0xf]
        %v1171 = vld [vmem:[%s13 + $0x1c] sm:$0xf]
        %v1172 = vld [vmem:[%s14] sm:$0x1]
        %v1173 = vpack.c.bf16 %v1161, %v1160
        %v1174 = vpack.c.bf16 %v1163, %v1162
        %v1176 = vlaneseq
        %v1177 = vshrl.u32 %v1176, 7
        %v1178 = vsub.s32 0, %v1177
        %v1179 = vrot.slane %v1172, %v1178
        %v1189 = vunpack.c.l.b16 %v1164
        %v1190 = vunpack.c.l.b16 %v1165
        %v1191 = vunpack.c.l.b16 %v1166
        %v1192 = vunpack.c.l.b16 %v1167
        %v1193 = vunpack.c.l.b16 %v1168
        %v1194 = vunpack.c.l.b16 %v1169
        %v1195 = vunpack.c.l.b16 %v1170
        %v1196 = vunpack.c.l.b16 %v1171
        %v1197 = vpack.c.b16 %v1190, %v1189
        %v1198 = vpack.c.b16 %v1192, %v1191
        %v1199 = vpack.c.b16 %v1194, %v1193
        %v1200 = vpack.c.b16 %v1196, %v1195
        %v1206 = vsel %vm1004, %v1173, 0
        %v1209 = vsel %vm1004, %v1174, 0
        %1211 = vmatprep.subr.bf16.mxu0 0
        %1212 = vmatpush1.bf16.msra.mxu0 %v1197
        %1213 = vmatprep.subr.bf16.mxu0 0
        %1214 = vmatpush1.bf16.msra.mxu0 %v1198
        %1215 = vmatprep.subr.bf16.mxu0 0
        %1216 = vmatpush1.bf16.msra.mxu0 %v1199
        %1217 = vmatprep.subr.bf16.mxu0 0
        %1218 = vmatpush1.bf16.msra.mxu0 %v1200
        %1219 = vmatprep.subr.bf16.mxu0 0
        %1220 = vmatpush1.bf16.msra.mxu0 0
        %1221 = vmatprep.subr.bf16.mxu0 0
        %1222 = vmatpush1.bf16.msra.mxu0 0
        %1223 = vmatprep.subr.bf16.mxu0 0
        %1224 = vmatpush1.bf16.msra.mxu0 0
        %1225 = vmatprep.subr.bf16.mxu0 0
        %1226 = vmatpush1.bf16.msra.mxu0 0
        %1227 = vmatprep.subr.bf16.mxu0 0
        %1228 = vmatpush1.bf16.msra.mxu0 0
        %1229 = vmatprep.subr.bf16.mxu0 0
        %1230 = vmatpush1.bf16.msra.mxu0 0
        %1231 = vmatprep.subr.bf16.mxu0 0
        %1232 = vmatpush1.bf16.msra.mxu0 0
        %1233 = vmatprep.subr.bf16.mxu0 0
        %1234 = vmatpush1.bf16.msra.mxu0 0
        %1235 = vmatprep.subr.bf16.mxu0 0
        %1236 = vmatpush1.bf16.msra.mxu0 0
        %1237 = vmatprep.subr.bf16.mxu0 0
        %1238 = vmatpush1.bf16.msra.mxu0 0
        %1239 = vmatprep.subr.bf16.mxu0 0
        %1240 = vmatpush1.bf16.msra.mxu0 0
        %1241 = vmatprep.subr.bf16.mxu0 0
        %1242 = vmatpush1.bf16.msra.mxu0 0
        %1243 = vmatprep.mubr.bf16.mxu0 0
        %1244 = vmatmul.mubr.bf16.gmra.mrb[0].mxu0 %v1206
        %v1245 = vpop.f32.mrb[0].mxu0
        %v1246 = vadd.f32 %v1179, %v1245
        %v1247 = vpop.f32.mrb[0].mxu0
        %v1248 = vpop.f32.mrb[0].mxu0
        %v1249 = vadd.f32 %v1179, %v1248
        %v1250 = vpop.f32.mrb[0].mxu0
        %1251 = vmatprep.mubr.bf16.mxu0 0
        %1252 = vmatmul.mubr.bf16.gmra.mrb[0].mxu0 %v1209
        %v1253 = vpop.f32.mrb[0].mxu0
        %v1254 = vadd.f32 %v1179, %v1253
        %v1255 = vpop.f32.mrb[0].mxu0
        %v1256 = vpop.f32.mrb[0].mxu0
        %v1257 = vadd.f32 %v1179, %v1256
        %v1258 = vpop.f32.mrb[0].mxu0
        %1259 = vdwg.mxu0
        %v1260 = vtanh.pop %v1246
        %v1261 = vtanh.pop %v1249
        %v1262 = vtanh.pop %v1254
        %v1263 = vtanh.pop %v1257
        %1264 = vst [vmem:[%s488] sm:$0xff] %v1260
        %1265 = vst [vmem:[%s488 + $0x8] sm:$0xff] %v1261
        %1266 = vst [vmem:[%s488 + $0x10] sm:$0xff] %v1262
        %1267 = vst [vmem:[%s488 + $0x18] sm:$0xff] %v1263
        %s1268 = sand.u32 %s357, 1
        %s1269 = scalar_lea.sflag [#allocation3], %s1268
        %s1270 = sand.u32 %s357, 1
        %s1271 = smul.addr %s1270, 32
        %s1272 = scalar_lea.vmem [#allocation2], %s1271
        // Predicated region
        $region81: #{tpu_custom_call.1} parent=79 // pred_check
          %p1273 = pneg %p367
        $region82: #{tpu_custom_call.1} parent=79 // pred_check_branch
          %1275 = sbr.rel (%p1273) target = $region84
        $region83: #{tpu_custom_call.1} parent=79 // pred_region
          %s1276 = smul.u32 4, %s29
          %s1278 = ssub.s32 512, 512
          %1279 = vsyncadd %s1269, %s1278
          %s1280 = smul.addr %s1276, 128
          %s1281 = scalar_lea.hbm %s15, %s1280
          %s1282 = sshll.u32 %s1272, 4
          %s1283 = int_to_ptr.vmem [resolvable:$true] %s1282
          %1288 = dma.vmem_to_hbm [thread:$0]  %s1283, 512, %s1281, %s1269, 128, 128, 8
        $region84: #{tpu_custom_call.1} parent=79 // pred_fallthru
          _
      $region80: #{tpu_custom_call.1} parent=5 // pred_fallthru
        _
      %p1289 = scmp.le.s32.totalorder 2, %s24
      // Predicated region
      $region85: #{tpu_custom_call.1} parent=5 // pred_check
        %p1290 = pneg %p1289
      $region86: #{tpu_custom_call.1} parent=5 // pred_check_branch
        %1292 = sbr.rel (%p1290) target = $region88
      $region87: #{tpu_custom_call.1} parent=5 // pred_region
        %s1293 = ssub.s32 %s24, 2
        // Predicated region
        $region89: #{tpu_custom_call.1} parent=87 // pred_check
          %p1294 = pneg %p373
        $region90: #{tpu_custom_call.1} parent=87 // pred_check_branch
          %1296 = sbr.rel (%p1294) target = $region92
        $region91: #{tpu_custom_call.1} parent=87 // pred_region
          %s1297 = sand.u32 %s358, 1
          %s1298 = scalar_lea.sflag [#allocation3], %s1297
          %s1299 = sand.u32 %s358, 1
          %s1300 = smul.addr %s1299, 32
          %s1301 = scalar_lea.vmem [#allocation2], %s1300
          %1302 = dma.done %s1298, 512
        $region92: #{tpu_custom_call.1} parent=87 // pred_fallthru
          _
      $region88: #{tpu_custom_call.1} parent=5 // pred_fallthru
        _
    $region6: #{tpu_custom_call.1} parent=1 // loop_footer
      %s28 = sadd.s32 1, %s24
    $region7: #{tpu_custom_call.1} parent=1 // loop_footer_branch
      %23 = sbr.rel target = $region3
    $region8: #{tpu_custom_call.1} parent=1 // loop_exit
      _
    %1303 = vsyncpa [#allocation3], 1
    %s1304 = scalar_lea.sflag [#allocation3], 1
    %1305 = vsyncpa %s1304, 1

</llo_original>
